<compile_context>
chip_gen: v5e
topology: v5e:2x2
jax: 0.10.0
libtpu: 0.0.40
codegen_flags: <defaults>
</compile_context>

<pallas_src>
import functools

import jax
import jax.numpy as jnp
from jax.experimental import pallas as pl
from jax.experimental.pallas import tpu as pltpu


def _cell_update(gates, c_prev, H):
    """PyTorch gate packing order along the 4H axis: [i, f, g, o] (all f32)."""
    i_g = jax.nn.sigmoid(gates[:, 0 * H:1 * H])
    f_g = jax.nn.sigmoid(gates[:, 1 * H:2 * H])
    g_g = jnp.tanh(gates[:, 2 * H:3 * H])
    o_g = jax.nn.sigmoid(gates[:, 3 * H:4 * H])
    c_new = f_g * c_prev + i_g * g_g
    h_new = o_g * jnp.tanh(c_new)
    return h_new, c_new


def _fused_lstm_kernel(*refs, num_layers, T, B_pad, H, unroll):
    # refs = [x, (wih, whh, bias) * L, fc1_w, fc1_b, fc2_w, fc2_b, out,
    #         gx_scr, (seq_scr if num_layers > 1)]
    x_ref = refs[0]
    idx = 1
    layer_refs = []
    for _ in range(num_layers):
        layer_refs.append(tuple(refs[idx:idx + 3]))  # (wih_t, whh_t, bias)
        idx += 3
    fc1_w_ref, fc1_b_ref, fc2_w_ref, fc2_b_ref = refs[idx:idx + 4]
    out_ref = refs[idx + 4]
    gx_scr = refs[idx + 5]
    seq_scr = refs[idx + 6] if num_layers > 1 else None

    h = jnp.zeros((B_pad, H), jnp.float32)
    c = jnp.zeros((B_pad, H), jnp.float32)

    for layer, (wih_ref, whh_ref, b_ref) in enumerate(layer_refs):
        # (1) Hoisted, time-independent input projection: one big MXU matmul
        #     over all T timesteps (bf16 operands, f32 accumulation + bias).
        if layer == 0:
            layer_in = x_ref[...]                                # bf16 already
        else:
            layer_in = seq_scr[...].astype(jnp.bfloat16)         # bulk cast
        gx_scr[...] = (
            jnp.dot(layer_in, wih_ref[...],
                    preferred_element_type=jnp.float32)
            + b_ref[...]
        )

        # (2) Serial recurrence. h/c start at zero (matches h0 = c0 = 0) and
        #     live in vregs as fori_loop carries; only the hidden sequence a
        #     subsequent layer consumes is written to VMEM scratch.
        write_seq = layer < num_layers - 1
        whh = whh_ref[...]            # (H, 4H) bf16, loop-invariant

        def step(t, carry, _write_seq=write_seq, _whh=whh):
            h_prev, c_prev = carry
            row = pl.multiple_of(t * B_pad, B_pad)   # sublane-aligned slice
            gates = gx_scr[pl.ds(row, B_pad), :] + jnp.dot(
                h_prev.astype(jnp.bfloat16), _whh,
                preferred_element_type=jnp.float32)
            h_new, c_new = _cell_update(gates, c_prev, H)
            if _write_seq:
                seq_scr[pl.ds(row, B_pad), :] = h_new
            return h_new, c_new

        h = jnp.zeros((B_pad, H), jnp.float32)
        c = jnp.zeros((B_pad, H), jnp.float32)
        h, c = jax.lax.fori_loop(0, T, step, (h, c), unroll=unroll)

    # (3) MLP head fused into the same kernel:
    #     fc1 -> ReLU -> (dropout = identity at inference) -> fc2.
    z = (jnp.dot(h.astype(jnp.bfloat16), fc1_w_ref[...],
                 preferred_element_type=jnp.float32) + fc1_b_ref[...])
    z = jnp.maximum(z, 0.0)
    y = (jnp.dot(z.astype(jnp.bfloat16), fc2_w_ref[...],
                 preferred_element_type=jnp.float32) + fc2_b_ref[...])
    out_ref[...] = y.astype(out_ref.dtype)


# ----------------------------------------------------------------------------
# Wrapper: one pallas_call for the whole forward pass.
# ----------------------------------------------------------------------------
def sensitivity_lstm_forward(x, params):
    """x: (B, T, input_size) batch-first, like PyTorch. Returns (B, num_classes)."""
    B, T, I = x.shape
    H = params["lstm"][0][1].shape[0]       # whh_t is (H, 4H)
    C = params["fc2_w"].shape[1]
    num_layers = len(params["lstm"])
    B_pad = ((B + 7) // 8) * 8              # sublane-aligned batch

    # Time-major flat slab, batch padded to B_pad, bf16 matmul operands:
    # row (t*B_pad + b) holds timestep t of batch element b.
    x_tm = jnp.transpose(x, (1, 0, 2))                     # (T, B, I)
    x_tm = jnp.pad(x_tm, ((0, 0), (0, B_pad - B), (0, 0)))
    x_flat = x_tm.reshape(T * B_pad, I).astype(jnp.bfloat16)

    args = [x_flat]
    for (wih_t, whh_t, bias) in params["lstm"]:
        args += [wih_t.astype(jnp.bfloat16), whh_t.astype(jnp.bfloat16),
                 bias.astype(jnp.float32)]
    args += [params["fc1_w"].astype(jnp.bfloat16),
             params["fc1_b"].reshape(1, -1).astype(jnp.float32),
             params["fc2_w"].astype(jnp.bfloat16),
             params["fc2_b"].reshape(1, -1).astype(jnp.float32)]

    # Scratch: hoisted gates_x slab (+ inter-layer hidden sequence only when a
    # next layer actually consumes it).  f32 keeps every per-step slice a
    # whole aligned tile; see TODO above for bf16 at large T*B.
    scratch_shapes = [pltpu.VMEM((T * B_pad, 4 * H), jnp.float32)]
    if num_layers > 1:
        scratch_shapes.append(pltpu.VMEM((T * B_pad, H), jnp.float32))

    # VMEM budget derived from the actual slabs, with generous headroom, kept
    # well under v7x's 64 MiB physical VMEM for these shapes.
    total_bytes = sum(int(a.size) * a.dtype.itemsize for a in args)
    total_bytes += B_pad * C * 4                               # output
    total_bytes += T * B_pad * 4 * H * 4                       # gx_scr
    if num_layers > 1:
        total_bytes += T * B_pad * H * 4                       # seq_scr
    vmem_limit = int(min(100 * 2**20, max(16 * 2**20,
                                          2 * total_bytes + 4 * 2**20)))

    kernel = functools.partial(
        _fused_lstm_kernel, num_layers=num_layers, T=T, B_pad=B_pad, H=H,
        unroll=min(8, T))

    out_pad = pl.pallas_call(
        kernel,
        out_shape=jax.ShapeDtypeStruct((B_pad, C), jnp.float32),
        in_specs=[pl.BlockSpec(memory_space=pltpu.MemorySpace.VMEM)
                  for _ in args],
        out_specs=pl.BlockSpec(memory_space=pltpu.MemorySpace.VMEM),
        scratch_shapes=scratch_shapes,
        compiler_params=pltpu.CompilerParams(vmem_limit_bytes=vmem_limit),
    )(*args)
    return out_pad[:B]


# ----------------------------------------------------------------------------
# Parameter init (deterministic, PyTorch-style U(-1/sqrt(fan), 1/sqrt(fan)))
# ----------------------------------------------------------------------------
def init_params(key, input_size, hidden_size, num_layers, num_classes):
    H = hidden_size
    k = 1.0 / jnp.sqrt(jnp.float32(H))
    params = {"lstm": []}
    for layer in range(num_layers):
        in_dim = input_size if layer == 0 else H
        key, k1, k2, k3, k4 = jax.random.split(key, 5)
        w_ih = jax.random.uniform(k1, (4 * H, in_dim), jnp.float32, -k, k)
        w_hh = jax.random.uniform(k2, (4 * H, H), jnp.float32, -k, k)
        b_ih = jax.random.uniform(k3, (4 * H,), jnp.float32, -k, k)
        b_hh = jax.random.uniform(k4, (4 * H,), jnp.float32, -k, k)
        params["lstm"].append(
            (w_ih.T, w_hh.T, (b_ih + b_hh).reshape(1, 4 * H)))
    key, k1, k2, k3, k4 = jax.random.split(key, 5)
    kf1 = 1.0 / jnp.sqrt(jnp.float32(H))
    kf2 = 1.0 / jnp.sqrt(jnp.float32(H // 2))
    params["fc1_w"] = jax.random.uniform(k1, (H, H // 2), jnp.float32, -kf1, kf1)
    params["fc1_b"] = jax.random.uniform(k2, (H // 2,), jnp.float32, -kf1, kf1)
    params["fc2_w"] = jax.random.uniform(k3, (H // 2, num_classes), jnp.float32, -kf2, kf2)
    params["fc2_b"] = jax.random.uniform(k4, (num_classes,), jnp.float32, -kf2, kf2)
    return params


# ----------------------------------------------------------------------------
# Pure-JAX f32 reference (eval mode) for a numerical sanity check.
# ----------------------------------------------------------------------------
def _reference_forward(x, params):
    B, T, _ = x.shape
    hp = jax.lax.Precision.HIGHEST
    seq = x
    for (wih_t, whh_t, bias) in params["lstm"]:
        H = whh_t.shape[0]
        h = jnp.zeros((B, H), jnp.float32)
        c = jnp.zeros((B, H), jnp.float32)
        outs = []
        for t in range(T):
            gates = (jnp.matmul(seq[:, t, :], wih_t, precision=hp)
                     + jnp.matmul(h, whh_t, precision=hp) + bias)
            i_g = jax.nn.sigmoid(gates[:, 0 * H:1 * H])
            f_g = jax.nn.sigmoid(gates[:, 1 * H:2 * H])
            g_g = jnp.tanh(gates[:, 2 * H:3 * H])
            o_g = jax.nn.sigmoid(gates[:, 3 * H:4 * H])
            c = f_g * c + i_g * g_g
            h = o_g * jnp.tanh(c)
            outs.append(h)
        seq = jnp.stack(outs, axis=1)
    h_last = seq[:, -1, :]
    z = jnp.maximum(
        jnp.matmul(h_last, params["fc1_w"], precision=hp) + params["fc1_b"], 0.0)
    return jnp.matmul(z, params["fc2_w"], precision=hp) + params["fc2_b"]


if __name__ == "__main__":
    input_size = 16
    hidden_size = 32       # 4H = 128 -> whole lane tile per gate block
    num_layers = 2
    num_classes = 4
    B, T = 2, 8

    key = jax.random.PRNGKey(0)
    key, pkey, xkey = jax.random.split(key, 3)
    params = init_params(pkey, input_size, hidden_size, num_layers, num_classes)
    x = jax.random.normal(xkey, (B, T, input_size), jnp.float32)

    out = jax.jit(sensitivity_lstm_forward)(x, params)
    out = jax.block_until_ready(out)
    assert out.shape == (B, num_classes), out.shape

    # Kernel uses bf16 MXU operands (f32 accumulation), reference is f32
    # HIGHEST -> compare with a bf16-appropriate tolerance.
    ref = _reference_forward(x, params)
    assert jnp.allclose(out, ref, atol=3e-2, rtol=3e-2), (out, ref)

    print("KERNEL_OK")
</pallas_src>

<mosaic_0001>
module attributes {stable_mosaic.version = 11 : i64} {
  func.func @_fused_lstm_kernel(%arg0: memref<64x16xbf16, #tpu.memory_space<vmem>>, %arg1: memref<16x128xbf16, #tpu.memory_space<vmem>>, %arg2: memref<32x128xbf16, #tpu.memory_space<vmem>>, %arg3: memref<1x128xf32, #tpu.memory_space<vmem>>, %arg4: memref<32x128xbf16, #tpu.memory_space<vmem>>, %arg5: memref<32x128xbf16, #tpu.memory_space<vmem>>, %arg6: memref<1x128xf32, #tpu.memory_space<vmem>>, %arg7: memref<32x16xbf16, #tpu.memory_space<vmem>>, %arg8: memref<1x16xf32, #tpu.memory_space<vmem>>, %arg9: memref<16x4xbf16, #tpu.memory_space<vmem>>, %arg10: memref<1x4xf32, #tpu.memory_space<vmem>>, %arg11: memref<8x4xf32, #tpu.memory_space<vmem>>, %arg12: memref<64x128xf32, #tpu.memory_space<vmem>>, %arg13: memref<64x32xf32, #tpu.memory_space<vmem>>) attributes {dimension_semantics = [], scalar_prefetch = 0 : i64, scratch_operands = 2 : i64, tpu.core_type = #tpu.core_type<tc>} {
    %c0 = arith.constant 0 : index
    %c0_0 = arith.constant 0 : index
    %0 = vector.load %arg0[%c0, %c0_0] : memref<64x16xbf16, #tpu.memory_space<vmem>>, vector<64x16xbf16>
    %c0_1 = arith.constant 0 : index
    %c0_2 = arith.constant 0 : index
    %1 = vector.load %arg1[%c0_1, %c0_2] : memref<16x128xbf16, #tpu.memory_space<vmem>>, vector<16x128xbf16>
    %cst = arith.constant dense<0.000000e+00> : vector<64x128xf32>
    %2 = tpu.matmul %0, %1, %cst {dimension_numbers = #tpu.dot_dimension_numbers<[1], [0], [0], [1], [0, 0, 1, 1], [], []>} : vector<64x16xbf16>, vector<16x128xbf16>, vector<64x128xf32> -> vector<64x128xf32>
    %c0_3 = arith.constant 0 : index
    %c0_4 = arith.constant 0 : index
    %3 = vector.load %arg3[%c0_3, %c0_4] : memref<1x128xf32, #tpu.memory_space<vmem>>, vector<1x128xf32>
    %4 = vector.broadcast %3 : vector<1x128xf32> to vector<64x128xf32>
    %5 = arith.addf %2, %4 : vector<64x128xf32>
    %c0_5 = arith.constant 0 : index
    %c0_6 = arith.constant 0 : index
    %6 = vector.load %arg12[%c0_5, %c0_6] : memref<64x128xf32, #tpu.memory_space<vmem>>, vector<64x128xf32>
    tpu.vector_store %arg12[%c0_5, %c0_6], %5 {strides = array<i32>} : memref<64x128xf32, #tpu.memory_space<vmem>>, vector<64x128xf32>,
    %c0_7 = arith.constant 0 : index
    %c0_8 = arith.constant 0 : index
    %7 = vector.load %arg2[%c0_7, %c0_8] : memref<32x128xbf16, #tpu.memory_space<vmem>>, vector<32x128xbf16>
    %cst_9 = arith.constant 0.000000e+00 : f32
    %8 = vector.broadcast %cst_9 : f32 to vector<8x32xf32>
    %cst_10 = arith.constant 0.000000e+00 : f32
    %9 = vector.broadcast %cst_10 : f32 to vector<8x32xf32>
    %c0_i32 = arith.constant 0 : i32
    %c8_i32 = arith.constant 8 : i32
    %10 = arith.muli %c0_i32, %c8_i32 : i32
    %11 = tpu.assume_multiple %10, 8 : i32
    %12 = arith.index_cast %11 : i32 to index
    %c0_11 = arith.constant 0 : index
    %13 = vector.load %arg12[%12, %c0_11] : memref<64x128xf32, #tpu.memory_space<vmem>>, vector<8x128xf32>
    %14 = arith.truncf %8 : vector<8x32xf32> to vector<8x32xbf16>
    %cst_12 = arith.constant dense<0.000000e+00> : vector<8x128xf32>
    %15 = tpu.matmul %14, %7, %cst_12 {dimension_numbers = #tpu.dot_dimension_numbers<[1], [0], [0], [1], [0, 0, 1, 1], [], []>} : vector<8x32xbf16>, vector<32x128xbf16>, vector<8x128xf32> -> vector<8x128xf32>
    %16 = arith.addf %13, %15 : vector<8x128xf32>
    %17 = vector.extract_strided_slice %16 {offsets = [0, 0], sizes = [8, 32], strides = [1, 1]} : vector<8x128xf32> to vector<8x32xf32>
    %18 = arith.negf %17 : vector<8x32xf32>
    %19 = math.exp %18 : vector<8x32xf32>
    %cst_13 = arith.constant 1.000000e+00 : f32
    %20 = vector.broadcast %cst_13 : f32 to vector<8x32xf32>
    %21 = arith.addf %20, %19 : vector<8x32xf32>
    %22 = arith.divf %20, %21 : vector<8x32xf32>
    %23 = vector.extract_strided_slice %16 {offsets = [0, 32], sizes = [8, 32], strides = [1, 1]} : vector<8x128xf32> to vector<8x32xf32>
    %24 = arith.negf %23 : vector<8x32xf32>
    %25 = math.exp %24 : vector<8x32xf32>
    %cst_14 = arith.constant 1.000000e+00 : f32
    %26 = vector.broadcast %cst_14 : f32 to vector<8x32xf32>
    %27 = arith.addf %26, %25 : vector<8x32xf32>
    %28 = arith.divf %26, %27 : vector<8x32xf32>
    %29 = vector.extract_strided_slice %16 {offsets = [0, 64], sizes = [8, 32], strides = [1, 1]} : vector<8x128xf32> to vector<8x32xf32>
    %30 = math.tanh %29 : vector<8x32xf32>
    %31 = vector.extract_strided_slice %16 {offsets = [0, 96], sizes = [8, 32], strides = [1, 1]} : vector<8x128xf32> to vector<8x32xf32>
    %32 = arith.negf %31 : vector<8x32xf32>
    %33 = math.exp %32 : vector<8x32xf32>
    %cst_15 = arith.constant 1.000000e+00 : f32
    %34 = vector.broadcast %cst_15 : f32 to vector<8x32xf32>
    %35 = arith.addf %34, %33 : vector<8x32xf32>
    %36 = arith.divf %34, %35 : vector<8x32xf32>
    %37 = arith.mulf %28, %9 : vector<8x32xf32>
    %38 = arith.mulf %22, %30 : vector<8x32xf32>
    %39 = arith.addf %37, %38 : vector<8x32xf32>
    %40 = math.tanh %39 : vector<8x32xf32>
    %41 = arith.mulf %36, %40 : vector<8x32xf32>
    %42 = arith.index_cast %11 : i32 to index
    %c0_16 = arith.constant 0 : index
    %43 = vector.load %arg13[%42, %c0_16] : memref<64x32xf32, #tpu.memory_space<vmem>>, vector<8x32xf32>
    tpu.vector_store %arg13[%42, %c0_16], %41 {strides = array<i32>} : memref<64x32xf32, #tpu.memory_space<vmem>>, vector<8x32xf32>,
    %c1_i32 = arith.constant 1 : i32
    %c8_i32_17 = arith.constant 8 : i32
    %44 = arith.muli %c1_i32, %c8_i32_17 : i32
    %45 = tpu.assume_multiple %44, 8 : i32
    %46 = arith.index_cast %45 : i32 to index
    %c0_18 = arith.constant 0 : index
    %47 = vector.load %arg12[%46, %c0_18] : memref<64x128xf32, #tpu.memory_space<vmem>>, vector<8x128xf32>
    %48 = arith.truncf %41 : vector<8x32xf32> to vector<8x32xbf16>
    %cst_19 = arith.constant dense<0.000000e+00> : vector<8x128xf32>
    %49 = tpu.matmul %48, %7, %cst_19 {dimension_numbers = #tpu.dot_dimension_numbers<[1], [0], [0], [1], [0, 0, 1, 1], [], []>} : vector<8x32xbf16>, vector<32x128xbf16>, vector<8x128xf32> -> vector<8x128xf32>
    %50 = arith.addf %47, %49 : vector<8x128xf32>
    %51 = vector.extract_strided_slice %50 {offsets = [0, 0], sizes = [8, 32], strides = [1, 1]} : vector<8x128xf32> to vector<8x32xf32>
    %52 = arith.negf %51 : vector<8x32xf32>
    %53 = math.exp %52 : vector<8x32xf32>
    %cst_20 = arith.constant 1.000000e+00 : f32
    %54 = vector.broadcast %cst_20 : f32 to vector<8x32xf32>
    %55 = arith.addf %54, %53 : vector<8x32xf32>
    %56 = arith.divf %54, %55 : vector<8x32xf32>
    %57 = vector.extract_strided_slice %50 {offsets = [0, 32], sizes = [8, 32], strides = [1, 1]} : vector<8x128xf32> to vector<8x32xf32>
    %58 = arith.negf %57 : vector<8x32xf32>
    %59 = math.exp %58 : vector<8x32xf32>
    %cst_21 = arith.constant 1.000000e+00 : f32
    %60 = vector.broadcast %cst_21 : f32 to vector<8x32xf32>
    %61 = arith.addf %60, %59 : vector<8x32xf32>
    %62 = arith.divf %60, %61 : vector<8x32xf32>
    %63 = vector.extract_strided_slice %50 {offsets = [0, 64], sizes = [8, 32], strides = [1, 1]} : vector<8x128xf32> to vector<8x32xf32>
    %64 = math.tanh %63 : vector<8x32xf32>
    %65 = vector.extract_strided_slice %50 {offsets = [0, 96], sizes = [8, 32], strides = [1, 1]} : vector<8x128xf32> to vector<8x32xf32>
    %66 = arith.negf %65 : vector<8x32xf32>
    %67 = math.exp %66 : vector<8x32xf32>
    %cst_22 = arith.constant 1.000000e+00 : f32
    %68 = vector.broadcast %cst_22 : f32 to vector<8x32xf32>
    %69 = arith.addf %68, %67 : vector<8x32xf32>
    %70 = arith.divf %68, %69 : vector<8x32xf32>
    %71 = arith.mulf %62, %39 : vector<8x32xf32>
    %72 = arith.mulf %56, %64 : vector<8x32xf32>
    %73 = arith.addf %71, %72 : vector<8x32xf32>
    %74 = math.tanh %73 : vector<8x32xf32>
    %75 = arith.mulf %70, %74 : vector<8x32xf32>
    %76 = arith.index_cast %45 : i32 to index
    %c0_23 = arith.constant 0 : index
    %77 = vector.load %arg13[%76, %c0_23] : memref<64x32xf32, #tpu.memory_space<vmem>>, vector<8x32xf32>
    tpu.vector_store %arg13[%76, %c0_23], %75 {strides = array<i32>} : memref<64x32xf32, #tpu.memory_space<vmem>>, vector<8x32xf32>,
    %c2_i32 = arith.constant 2 : i32
    %c8_i32_24 = arith.constant 8 : i32
    %78 = arith.muli %c2_i32, %c8_i32_24 : i32
    %79 = tpu.assume_multiple %78, 8 : i32
    %80 = arith.index_cast %79 : i32 to index
    %c0_25 = arith.constant 0 : index
    %81 = vector.load %arg12[%80, %c0_25] : memref<64x128xf32, #tpu.memory_space<vmem>>, vector<8x128xf32>
    %82 = arith.truncf %75 : vector<8x32xf32> to vector<8x32xbf16>
    %cst_26 = arith.constant dense<0.000000e+00> : vector<8x128xf32>
    %83 = tpu.matmul %82, %7, %cst_26 {dimension_numbers = #tpu.dot_dimension_numbers<[1], [0], [0], [1], [0, 0, 1, 1], [], []>} : vector<8x32xbf16>, vector<32x128xbf16>, vector<8x128xf32> -> vector<8x128xf32>
    %84 = arith.addf %81, %83 : vector<8x128xf32>
    %85 = vector.extract_strided_slice %84 {offsets = [0, 0], sizes = [8, 32], strides = [1, 1]} : vector<8x128xf32> to vector<8x32xf32>
    %86 = arith.negf %85 : vector<8x32xf32>
    %87 = math.exp %86 : vector<8x32xf32>
    %cst_27 = arith.constant 1.000000e+00 : f32
    %88 = vector.broadcast %cst_27 : f32 to vector<8x32xf32>
    %89 = arith.addf %88, %87 : vector<8x32xf32>
    %90 = arith.divf %88, %89 : vector<8x32xf32>
    %91 = vector.extract_strided_slice %84 {offsets = [0, 32], sizes = [8, 32], strides = [1, 1]} : vector<8x128xf32> to vector<8x32xf32>
    %92 = arith.negf %91 : vector<8x32xf32>
    %93 = math.exp %92 : vector<8x32xf32>
    %cst_28 = arith.constant 1.000000e+00 : f32
    %94 = vector.broadcast %cst_28 : f32 to vector<8x32xf32>
    %95 = arith.addf %94, %93 : vector<8x32xf32>
    %96 = arith.divf %94, %95 : vector<8x32xf32>
    %97 = vector.extract_strided_slice %84 {offsets = [0, 64], sizes = [8, 32], strides = [1, 1]} : vector<8x128xf32> to vector<8x32xf32>
    %98 = math.tanh %97 : vector<8x32xf32>
    %99 = vector.extract_strided_slice %84 {offsets = [0, 96], sizes = [8, 32], strides = [1, 1]} : vector<8x128xf32> to vector<8x32xf32>
    %100 = arith.negf %99 : vector<8x32xf32>
    %101 = math.exp %100 : vector<8x32xf32>
    %cst_29 = arith.constant 1.000000e+00 : f32
    %102 = vector.broadcast %cst_29 : f32 to vector<8x32xf32>
    %103 = arith.addf %102, %101 : vector<8x32xf32>
    %104 = arith.divf %102, %103 : vector<8x32xf32>
    %105 = arith.mulf %96, %73 : vector<8x32xf32>
    %106 = arith.mulf %90, %98 : vector<8x32xf32>
    %107 = arith.addf %105, %106 : vector<8x32xf32>
    %108 = math.tanh %107 : vector<8x32xf32>
    %109 = arith.mulf %104, %108 : vector<8x32xf32>
    %110 = arith.index_cast %79 : i32 to index
    %c0_30 = arith.constant 0 : index
    %111 = vector.load %arg13[%110, %c0_30] : memref<64x32xf32, #tpu.memory_space<vmem>>, vector<8x32xf32>
    tpu.vector_store %arg13[%110, %c0_30], %109 {strides = array<i32>} : memref<64x32xf32, #tpu.memory_space<vmem>>, vector<8x32xf32>,
    %c3_i32 = arith.constant 3 : i32
    %c8_i32_31 = arith.constant 8 : i32
    %112 = arith.muli %c3_i32, %c8_i32_31 : i32
    %113 = tpu.assume_multiple %112, 8 : i32
    %114 = arith.index_cast %113 : i32 to index
    %c0_32 = arith.constant 0 : index
    %115 = vector.load %arg12[%114, %c0_32] : memref<64x128xf32, #tpu.memory_space<vmem>>, vector<8x128xf32>
    %116 = arith.truncf %109 : vector<8x32xf32> to vector<8x32xbf16>
    %cst_33 = arith.constant dense<0.000000e+00> : vector<8x128xf32>
    %117 = tpu.matmul %116, %7, %cst_33 {dimension_numbers = #tpu.dot_dimension_numbers<[1], [0], [0], [1], [0, 0, 1, 1], [], []>} : vector<8x32xbf16>, vector<32x128xbf16>, vector<8x128xf32> -> vector<8x128xf32>
    %118 = arith.addf %115, %117 : vector<8x128xf32>
    %119 = vector.extract_strided_slice %118 {offsets = [0, 0], sizes = [8, 32], strides = [1, 1]} : vector<8x128xf32> to vector<8x32xf32>
    %120 = arith.negf %119 : vector<8x32xf32>
    %121 = math.exp %120 : vector<8x32xf32>
    %cst_34 = arith.constant 1.000000e+00 : f32
    %122 = vector.broadcast %cst_34 : f32 to vector<8x32xf32>
    %123 = arith.addf %122, %121 : vector<8x32xf32>
    %124 = arith.divf %122, %123 : vector<8x32xf32>
    %125 = vector.extract_strided_slice %118 {offsets = [0, 32], sizes = [8, 32], strides = [1, 1]} : vector<8x128xf32> to vector<8x32xf32>
    %126 = arith.negf %125 : vector<8x32xf32>
    %127 = math.exp %126 : vector<8x32xf32>
    %cst_35 = arith.constant 1.000000e+00 : f32
    %128 = vector.broadcast %cst_35 : f32 to vector<8x32xf32>
    %129 = arith.addf %128, %127 : vector<8x32xf32>
    %130 = arith.divf %128, %129 : vector<8x32xf32>
    %131 = vector.extract_strided_slice %118 {offsets = [0, 64], sizes = [8, 32], strides = [1, 1]} : vector<8x128xf32> to vector<8x32xf32>
    %132 = math.tanh %131 : vector<8x32xf32>
    %133 = vector.extract_strided_slice %118 {offsets = [0, 96], sizes = [8, 32], strides = [1, 1]} : vector<8x128xf32> to vector<8x32xf32>
    %134 = arith.negf %133 : vector<8x32xf32>
    %135 = math.exp %134 : vector<8x32xf32>
    %cst_36 = arith.constant 1.000000e+00 : f32
    %136 = vector.broadcast %cst_36 : f32 to vector<8x32xf32>
    %137 = arith.addf %136, %135 : vector<8x32xf32>
    %138 = arith.divf %136, %137 : vector<8x32xf32>
    %139 = arith.mulf %130, %107 : vector<8x32xf32>
    %140 = arith.mulf %124, %132 : vector<8x32xf32>
    %141 = arith.addf %139, %140 : vector<8x32xf32>
    %142 = math.tanh %141 : vector<8x32xf32>
    %143 = arith.mulf %138, %142 : vector<8x32xf32>
    %144 = arith.index_cast %113 : i32 to index
    %c0_37 = arith.constant 0 : index
    %145 = vector.load %arg13[%144, %c0_37] : memref<64x32xf32, #tpu.memory_space<vmem>>, vector<8x32xf32>
    tpu.vector_store %arg13[%144, %c0_37], %143 {strides = array<i32>} : memref<64x32xf32, #tpu.memory_space<vmem>>, vector<8x32xf32>,
    %c4_i32 = arith.constant 4 : i32
    %c8_i32_38 = arith.constant 8 : i32
    %146 = arith.muli %c4_i32, %c8_i32_38 : i32
    %147 = tpu.assume_multiple %146, 8 : i32
    %148 = arith.index_cast %147 : i32 to index
    %c0_39 = arith.constant 0 : index
    %149 = vector.load %arg12[%148, %c0_39] : memref<64x128xf32, #tpu.memory_space<vmem>>, vector<8x128xf32>
    %150 = arith.truncf %143 : vector<8x32xf32> to vector<8x32xbf16>
    %cst_40 = arith.constant dense<0.000000e+00> : vector<8x128xf32>
    %151 = tpu.matmul %150, %7, %cst_40 {dimension_numbers = #tpu.dot_dimension_numbers<[1], [0], [0], [1], [0, 0, 1, 1], [], []>} : vector<8x32xbf16>, vector<32x128xbf16>, vector<8x128xf32> -> vector<8x128xf32>
    %152 = arith.addf %149, %151 : vector<8x128xf32>
    %153 = vector.extract_strided_slice %152 {offsets = [0, 0], sizes = [8, 32], strides = [1, 1]} : vector<8x128xf32> to vector<8x32xf32>
    %154 = arith.negf %153 : vector<8x32xf32>
    %155 = math.exp %154 : vector<8x32xf32>
    %cst_41 = arith.constant 1.000000e+00 : f32
    %156 = vector.broadcast %cst_41 : f32 to vector<8x32xf32>
    %157 = arith.addf %156, %155 : vector<8x32xf32>
    %158 = arith.divf %156, %157 : vector<8x32xf32>
    %159 = vector.extract_strided_slice %152 {offsets = [0, 32], sizes = [8, 32], strides = [1, 1]} : vector<8x128xf32> to vector<8x32xf32>
    %160 = arith.negf %159 : vector<8x32xf32>
    %161 = math.exp %160 : vector<8x32xf32>
    %cst_42 = arith.constant 1.000000e+00 : f32
    %162 = vector.broadcast %cst_42 : f32 to vector<8x32xf32>
    %163 = arith.addf %162, %161 : vector<8x32xf32>
    %164 = arith.divf %162, %163 : vector<8x32xf32>
    %165 = vector.extract_strided_slice %152 {offsets = [0, 64], sizes = [8, 32], strides = [1, 1]} : vector<8x128xf32> to vector<8x32xf32>
    %166 = math.tanh %165 : vector<8x32xf32>
    %167 = vector.extract_strided_slice %152 {offsets = [0, 96], sizes = [8, 32], strides = [1, 1]} : vector<8x128xf32> to vector<8x32xf32>
    %168 = arith.negf %167 : vector<8x32xf32>
    %169 = math.exp %168 : vector<8x32xf32>
    %cst_43 = arith.constant 1.000000e+00 : f32
    %170 = vector.broadcast %cst_43 : f32 to vector<8x32xf32>
    %171 = arith.addf %170, %169 : vector<8x32xf32>
    %172 = arith.divf %170, %171 : vector<8x32xf32>
    %173 = arith.mulf %164, %141 : vector<8x32xf32>
    %174 = arith.mulf %158, %166 : vector<8x32xf32>
    %175 = arith.addf %173, %174 : vector<8x32xf32>
    %176 = math.tanh %175 : vector<8x32xf32>
    %177 = arith.mulf %172, %176 : vector<8x32xf32>
    %178 = arith.index_cast %147 : i32 to index
    %c0_44 = arith.constant 0 : index
    %179 = vector.load %arg13[%178, %c0_44] : memref<64x32xf32, #tpu.memory_space<vmem>>, vector<8x32xf32>
    tpu.vector_store %arg13[%178, %c0_44], %177 {strides = array<i32>} : memref<64x32xf32, #tpu.memory_space<vmem>>, vector<8x32xf32>,
    %c5_i32 = arith.constant 5 : i32
    %c8_i32_45 = arith.constant 8 : i32
    %180 = arith.muli %c5_i32, %c8_i32_45 : i32
    %181 = tpu.assume_multiple %180, 8 : i32
    %182 = arith.index_cast %181 : i32 to index
    %c0_46 = arith.constant 0 : index
    %183 = vector.load %arg12[%182, %c0_46] : memref<64x128xf32, #tpu.memory_space<vmem>>, vector<8x128xf32>
    %184 = arith.truncf %177 : vector<8x32xf32> to vector<8x32xbf16>
    %cst_47 = arith.constant dense<0.000000e+00> : vector<8x128xf32>
    %185 = tpu.matmul %184, %7, %cst_47 {dimension_numbers = #tpu.dot_dimension_numbers<[1], [0], [0], [1], [0, 0, 1, 1], [], []>} : vector<8x32xbf16>, vector<32x128xbf16>, vector<8x128xf32> -> vector<8x128xf32>
    %186 = arith.addf %183, %185 : vector<8x128xf32>
    %187 = vector.extract_strided_slice %186 {offsets = [0, 0], sizes = [8, 32], strides = [1, 1]} : vector<8x128xf32> to vector<8x32xf32>
    %188 = arith.negf %187 : vector<8x32xf32>
    %189 = math.exp %188 : vector<8x32xf32>
    %cst_48 = arith.constant 1.000000e+00 : f32
    %190 = vector.broadcast %cst_48 : f32 to vector<8x32xf32>
    %191 = arith.addf %190, %189 : vector<8x32xf32>
    %192 = arith.divf %190, %191 : vector<8x32xf32>
    %193 = vector.extract_strided_slice %186 {offsets = [0, 32], sizes = [8, 32], strides = [1, 1]} : vector<8x128xf32> to vector<8x32xf32>
    %194 = arith.negf %193 : vector<8x32xf32>
    %195 = math.exp %194 : vector<8x32xf32>
    %cst_49 = arith.constant 1.000000e+00 : f32
    %196 = vector.broadcast %cst_49 : f32 to vector<8x32xf32>
    %197 = arith.addf %196, %195 : vector<8x32xf32>
    %198 = arith.divf %196, %197 : vector<8x32xf32>
    %199 = vector.extract_strided_slice %186 {offsets = [0, 64], sizes = [8, 32], strides = [1, 1]} : vector<8x128xf32> to vector<8x32xf32>
    %200 = math.tanh %199 : vector<8x32xf32>
    %201 = vector.extract_strided_slice %186 {offsets = [0, 96], sizes = [8, 32], strides = [1, 1]} : vector<8x128xf32> to vector<8x32xf32>
    %202 = arith.negf %201 : vector<8x32xf32>
    %203 = math.exp %202 : vector<8x32xf32>
    %cst_50 = arith.constant 1.000000e+00 : f32
    %204 = vector.broadcast %cst_50 : f32 to vector<8x32xf32>
    %205 = arith.addf %204, %203 : vector<8x32xf32>
    %206 = arith.divf %204, %205 : vector<8x32xf32>
    %207 = arith.mulf %198, %175 : vector<8x32xf32>
    %208 = arith.mulf %192, %200 : vector<8x32xf32>
    %209 = arith.addf %207, %208 : vector<8x32xf32>
    %210 = math.tanh %209 : vector<8x32xf32>
    %211 = arith.mulf %206, %210 : vector<8x32xf32>
    %212 = arith.index_cast %181 : i32 to index
    %c0_51 = arith.constant 0 : index
    %213 = vector.load %arg13[%212, %c0_51] : memref<64x32xf32, #tpu.memory_space<vmem>>, vector<8x32xf32>
    tpu.vector_store %arg13[%212, %c0_51], %211 {strides = array<i32>} : memref<64x32xf32, #tpu.memory_space<vmem>>, vector<8x32xf32>,
    %c6_i32 = arith.constant 6 : i32
    %c8_i32_52 = arith.constant 8 : i32
    %214 = arith.muli %c6_i32, %c8_i32_52 : i32
    %215 = tpu.assume_multiple %214, 8 : i32
    %216 = arith.index_cast %215 : i32 to index
    %c0_53 = arith.constant 0 : index
    %217 = vector.load %arg12[%216, %c0_53] : memref<64x128xf32, #tpu.memory_space<vmem>>, vector<8x128xf32>
    %218 = arith.truncf %211 : vector<8x32xf32> to vector<8x32xbf16>
    %cst_54 = arith.constant dense<0.000000e+00> : vector<8x128xf32>
    %219 = tpu.matmul %218, %7, %cst_54 {dimension_numbers = #tpu.dot_dimension_numbers<[1], [0], [0], [1], [0, 0, 1, 1], [], []>} : vector<8x32xbf16>, vector<32x128xbf16>, vector<8x128xf32> -> vector<8x128xf32>
    %220 = arith.addf %217, %219 : vector<8x128xf32>
    %221 = vector.extract_strided_slice %220 {offsets = [0, 0], sizes = [8, 32], strides = [1, 1]} : vector<8x128xf32> to vector<8x32xf32>
    %222 = arith.negf %221 : vector<8x32xf32>
    %223 = math.exp %222 : vector<8x32xf32>
    %cst_55 = arith.constant 1.000000e+00 : f32
    %224 = vector.broadcast %cst_55 : f32 to vector<8x32xf32>
    %225 = arith.addf %224, %223 : vector<8x32xf32>
    %226 = arith.divf %224, %225 : vector<8x32xf32>
    %227 = vector.extract_strided_slice %220 {offsets = [0, 32], sizes = [8, 32], strides = [1, 1]} : vector<8x128xf32> to vector<8x32xf32>
    %228 = arith.negf %227 : vector<8x32xf32>
    %229 = math.exp %228 : vector<8x32xf32>
    %cst_56 = arith.constant 1.000000e+00 : f32
    %230 = vector.broadcast %cst_56 : f32 to vector<8x32xf32>
    %231 = arith.addf %230, %229 : vector<8x32xf32>
    %232 = arith.divf %230, %231 : vector<8x32xf32>
    %233 = vector.extract_strided_slice %220 {offsets = [0, 64], sizes = [8, 32], strides = [1, 1]} : vector<8x128xf32> to vector<8x32xf32>
    %234 = math.tanh %233 : vector<8x32xf32>
    %235 = vector.extract_strided_slice %220 {offsets = [0, 96], sizes = [8, 32], strides = [1, 1]} : vector<8x128xf32> to vector<8x32xf32>
    %236 = arith.negf %235 : vector<8x32xf32>
    %237 = math.exp %236 : vector<8x32xf32>
    %cst_57 = arith.constant 1.000000e+00 : f32
    %238 = vector.broadcast %cst_57 : f32 to vector<8x32xf32>
    %239 = arith.addf %238, %237 : vector<8x32xf32>
    %240 = arith.divf %238, %239 : vector<8x32xf32>
    %241 = arith.mulf %232, %209 : vector<8x32xf32>
    %242 = arith.mulf %226, %234 : vector<8x32xf32>
    %243 = arith.addf %241, %242 : vector<8x32xf32>
    %244 = math.tanh %243 : vector<8x32xf32>
    %245 = arith.mulf %240, %244 : vector<8x32xf32>
    %246 = arith.index_cast %215 : i32 to index
    %c0_58 = arith.constant 0 : index
    %247 = vector.load %arg13[%246, %c0_58] : memref<64x32xf32, #tpu.memory_space<vmem>>, vector<8x32xf32>
    tpu.vector_store %arg13[%246, %c0_58], %245 {strides = array<i32>} : memref<64x32xf32, #tpu.memory_space<vmem>>, vector<8x32xf32>,
    %c7_i32 = arith.constant 7 : i32
    %c8_i32_59 = arith.constant 8 : i32
    %248 = arith.muli %c7_i32, %c8_i32_59 : i32
    %249 = tpu.assume_multiple %248, 8 : i32
    %250 = arith.index_cast %249 : i32 to index
    %c0_60 = arith.constant 0 : index
    %251 = vector.load %arg12[%250, %c0_60] : memref<64x128xf32, #tpu.memory_space<vmem>>, vector<8x128xf32>
    %252 = arith.truncf %245 : vector<8x32xf32> to vector<8x32xbf16>
    %cst_61 = arith.constant dense<0.000000e+00> : vector<8x128xf32>
    %253 = tpu.matmul %252, %7, %cst_61 {dimension_numbers = #tpu.dot_dimension_numbers<[1], [0], [0], [1], [0, 0, 1, 1], [], []>} : vector<8x32xbf16>, vector<32x128xbf16>, vector<8x128xf32> -> vector<8x128xf32>
    %254 = arith.addf %251, %253 : vector<8x128xf32>
    %255 = vector.extract_strided_slice %254 {offsets = [0, 0], sizes = [8, 32], strides = [1, 1]} : vector<8x128xf32> to vector<8x32xf32>
    %256 = arith.negf %255 : vector<8x32xf32>
    %257 = math.exp %256 : vector<8x32xf32>
    %cst_62 = arith.constant 1.000000e+00 : f32
    %258 = vector.broadcast %cst_62 : f32 to vector<8x32xf32>
    %259 = arith.addf %258, %257 : vector<8x32xf32>
    %260 = arith.divf %258, %259 : vector<8x32xf32>
    %261 = vector.extract_strided_slice %254 {offsets = [0, 32], sizes = [8, 32], strides = [1, 1]} : vector<8x128xf32> to vector<8x32xf32>
    %262 = arith.negf %261 : vector<8x32xf32>
    %263 = math.exp %262 : vector<8x32xf32>
    %cst_63 = arith.constant 1.000000e+00 : f32
    %264 = vector.broadcast %cst_63 : f32 to vector<8x32xf32>
    %265 = arith.addf %264, %263 : vector<8x32xf32>
    %266 = arith.divf %264, %265 : vector<8x32xf32>
    %267 = vector.extract_strided_slice %254 {offsets = [0, 64], sizes = [8, 32], strides = [1, 1]} : vector<8x128xf32> to vector<8x32xf32>
    %268 = math.tanh %267 : vector<8x32xf32>
    %269 = vector.extract_strided_slice %254 {offsets = [0, 96], sizes = [8, 32], strides = [1, 1]} : vector<8x128xf32> to vector<8x32xf32>
    %270 = arith.negf %269 : vector<8x32xf32>
    %271 = math.exp %270 : vector<8x32xf32>
    %cst_64 = arith.constant 1.000000e+00 : f32
    %272 = vector.broadcast %cst_64 : f32 to vector<8x32xf32>
    %273 = arith.addf %272, %271 : vector<8x32xf32>
    %274 = arith.divf %272, %273 : vector<8x32xf32>
    %275 = arith.mulf %266, %243 : vector<8x32xf32>
    %276 = arith.mulf %260, %268 : vector<8x32xf32>
    %277 = arith.addf %275, %276 : vector<8x32xf32>
    %278 = math.tanh %277 : vector<8x32xf32>
    %279 = arith.mulf %274, %278 : vector<8x32xf32>
    %280 = arith.index_cast %249 : i32 to index
    %c0_65 = arith.constant 0 : index
    %281 = vector.load %arg13[%280, %c0_65] : memref<64x32xf32, #tpu.memory_space<vmem>>, vector<8x32xf32>
    tpu.vector_store %arg13[%280, %c0_65], %279 {strides = array<i32>} : memref<64x32xf32, #tpu.memory_space<vmem>>, vector<8x32xf32>,
    %c8_i32_66 = arith.constant 8 : i32
    %c0_67 = arith.constant 0 : index
    %c0_68 = arith.constant 0 : index
    %282 = vector.load %arg13[%c0_67, %c0_68] : memref<64x32xf32, #tpu.memory_space<vmem>>, vector<64x32xf32>
    %283 = arith.truncf %282 : vector<64x32xf32> to vector<64x32xbf16>
    %c0_69 = arith.constant 0 : index
    %c0_70 = arith.constant 0 : index
    %284 = vector.load %arg4[%c0_69, %c0_70] : memref<32x128xbf16, #tpu.memory_space<vmem>>, vector<32x128xbf16>
    %cst_71 = arith.constant dense<0.000000e+00> : vector<64x128xf32>
    %285 = tpu.matmul %283, %284, %cst_71 {dimension_numbers = #tpu.dot_dimension_numbers<[1], [0], [0], [1], [0, 0, 1, 1], [], []>} : vector<64x32xbf16>, vector<32x128xbf16>, vector<64x128xf32> -> vector<64x128xf32>
    %c0_72 = arith.constant 0 : index
    %c0_73 = arith.constant 0 : index
    %286 = vector.load %arg6[%c0_72, %c0_73] : memref<1x128xf32, #tpu.memory_space<vmem>>, vector<1x128xf32>
    %287 = vector.broadcast %286 : vector<1x128xf32> to vector<64x128xf32>
    %288 = arith.addf %285, %287 : vector<64x128xf32>
    %c0_74 = arith.constant 0 : index
    %c0_75 = arith.constant 0 : index
    %289 = vector.load %arg12[%c0_74, %c0_75] : memref<64x128xf32, #tpu.memory_space<vmem>>, vector<64x128xf32>
    tpu.vector_store %arg12[%c0_74, %c0_75], %288 {strides = array<i32>} : memref<64x128xf32, #tpu.memory_space<vmem>>, vector<64x128xf32>,
    %c0_76 = arith.constant 0 : index
    %c0_77 = arith.constant 0 : index
    %290 = vector.load %arg5[%c0_76, %c0_77] : memref<32x128xbf16, #tpu.memory_space<vmem>>, vector<32x128xbf16>
    %cst_78 = arith.constant 0.000000e+00 : f32
    %291 = vector.broadcast %cst_78 : f32 to vector<8x32xf32>
    %cst_79 = arith.constant 0.000000e+00 : f32
    %292 = vector.broadcast %cst_79 : f32 to vector<8x32xf32>
    %c0_i32_80 = arith.constant 0 : i32
    %c8_i32_81 = arith.constant 8 : i32
    %293 = arith.muli %c0_i32_80, %c8_i32_81 : i32
    %294 = tpu.assume_multiple %293, 8 : i32
    %295 = arith.index_cast %294 : i32 to index
    %c0_82 = arith.constant 0 : index
    %296 = vector.load %arg12[%295, %c0_82] : memref<64x128xf32, #tpu.memory_space<vmem>>, vector<8x128xf32>
    %297 = arith.truncf %291 : vector<8x32xf32> to vector<8x32xbf16>
    %cst_83 = arith.constant dense<0.000000e+00> : vector<8x128xf32>
    %298 = tpu.matmul %297, %290, %cst_83 {dimension_numbers = #tpu.dot_dimension_numbers<[1], [0], [0], [1], [0, 0, 1, 1], [], []>} : vector<8x32xbf16>, vector<32x128xbf16>, vector<8x128xf32> -> vector<8x128xf32>
    %299 = arith.addf %296, %298 : vector<8x128xf32>
    %300 = vector.extract_strided_slice %299 {offsets = [0, 0], sizes = [8, 32], strides = [1, 1]} : vector<8x128xf32> to vector<8x32xf32>
    %301 = arith.negf %300 : vector<8x32xf32>
    %302 = math.exp %301 : vector<8x32xf32>
    %cst_84 = arith.constant 1.000000e+00 : f32
    %303 = vector.broadcast %cst_84 : f32 to vector<8x32xf32>
    %304 = arith.addf %303, %302 : vector<8x32xf32>
    %305 = arith.divf %303, %304 : vector<8x32xf32>
    %306 = vector.extract_strided_slice %299 {offsets = [0, 32], sizes = [8, 32], strides = [1, 1]} : vector<8x128xf32> to vector<8x32xf32>
    %307 = arith.negf %306 : vector<8x32xf32>
    %308 = math.exp %307 : vector<8x32xf32>
    %cst_85 = arith.constant 1.000000e+00 : f32
    %309 = vector.broadcast %cst_85 : f32 to vector<8x32xf32>
    %310 = arith.addf %309, %308 : vector<8x32xf32>
    %311 = arith.divf %309, %310 : vector<8x32xf32>
    %312 = vector.extract_strided_slice %299 {offsets = [0, 64], sizes = [8, 32], strides = [1, 1]} : vector<8x128xf32> to vector<8x32xf32>
    %313 = math.tanh %312 : vector<8x32xf32>
    %314 = vector.extract_strided_slice %299 {offsets = [0, 96], sizes = [8, 32], strides = [1, 1]} : vector<8x128xf32> to vector<8x32xf32>
    %315 = arith.negf %314 : vector<8x32xf32>
    %316 = math.exp %315 : vector<8x32xf32>
    %cst_86 = arith.constant 1.000000e+00 : f32
    %317 = vector.broadcast %cst_86 : f32 to vector<8x32xf32>
    %318 = arith.addf %317, %316 : vector<8x32xf32>
    %319 = arith.divf %317, %318 : vector<8x32xf32>
    %320 = arith.mulf %311, %292 : vector<8x32xf32>
    %321 = arith.mulf %305, %313 : vector<8x32xf32>
    %322 = arith.addf %320, %321 : vector<8x32xf32>
    %323 = math.tanh %322 : vector<8x32xf32>
    %324 = arith.mulf %319, %323 : vector<8x32xf32>
    %c1_i32_87 = arith.constant 1 : i32
    %c8_i32_88 = arith.constant 8 : i32
    %325 = arith.muli %c1_i32_87, %c8_i32_88 : i32
    %326 = tpu.assume_multiple %325, 8 : i32
    %327 = arith.index_cast %326 : i32 to index
    %c0_89 = arith.constant 0 : index
    %328 = vector.load %arg12[%327, %c0_89] : memref<64x128xf32, #tpu.memory_space<vmem>>, vector<8x128xf32>
    %329 = arith.truncf %324 : vector<8x32xf32> to vector<8x32xbf16>
    %cst_90 = arith.constant dense<0.000000e+00> : vector<8x128xf32>
    %330 = tpu.matmul %329, %290, %cst_90 {dimension_numbers = #tpu.dot_dimension_numbers<[1], [0], [0], [1], [0, 0, 1, 1], [], []>} : vector<8x32xbf16>, vector<32x128xbf16>, vector<8x128xf32> -> vector<8x128xf32>
    %331 = arith.addf %328, %330 : vector<8x128xf32>
    %332 = vector.extract_strided_slice %331 {offsets = [0, 0], sizes = [8, 32], strides = [1, 1]} : vector<8x128xf32> to vector<8x32xf32>
    %333 = arith.negf %332 : vector<8x32xf32>
    %334 = math.exp %333 : vector<8x32xf32>
    %cst_91 = arith.constant 1.000000e+00 : f32
    %335 = vector.broadcast %cst_91 : f32 to vector<8x32xf32>
    %336 = arith.addf %335, %334 : vector<8x32xf32>
    %337 = arith.divf %335, %336 : vector<8x32xf32>
    %338 = vector.extract_strided_slice %331 {offsets = [0, 32], sizes = [8, 32], strides = [1, 1]} : vector<8x128xf32> to vector<8x32xf32>
    %339 = arith.negf %338 : vector<8x32xf32>
    %340 = math.exp %339 : vector<8x32xf32>
    %cst_92 = arith.constant 1.000000e+00 : f32
    %341 = vector.broadcast %cst_92 : f32 to vector<8x32xf32>
    %342 = arith.addf %341, %340 : vector<8x32xf32>
    %343 = arith.divf %341, %342 : vector<8x32xf32>
    %344 = vector.extract_strided_slice %331 {offsets = [0, 64], sizes = [8, 32], strides = [1, 1]} : vector<8x128xf32> to vector<8x32xf32>
    %345 = math.tanh %344 : vector<8x32xf32>
    %346 = vector.extract_strided_slice %331 {offsets = [0, 96], sizes = [8, 32], strides = [1, 1]} : vector<8x128xf32> to vector<8x32xf32>
    %347 = arith.negf %346 : vector<8x32xf32>
    %348 = math.exp %347 : vector<8x32xf32>
    %cst_93 = arith.constant 1.000000e+00 : f32
    %349 = vector.broadcast %cst_93 : f32 to vector<8x32xf32>
    %350 = arith.addf %349, %348 : vector<8x32xf32>
    %351 = arith.divf %349, %350 : vector<8x32xf32>
    %352 = arith.mulf %343, %322 : vector<8x32xf32>
    %353 = arith.mulf %337, %345 : vector<8x32xf32>
    %354 = arith.addf %352, %353 : vector<8x32xf32>
    %355 = math.tanh %354 : vector<8x32xf32>
    %356 = arith.mulf %351, %355 : vector<8x32xf32>
    %c2_i32_94 = arith.constant 2 : i32
    %c8_i32_95 = arith.constant 8 : i32
    %357 = arith.muli %c2_i32_94, %c8_i32_95 : i32
    %358 = tpu.assume_multiple %357, 8 : i32
    %359 = arith.index_cast %358 : i32 to index
    %c0_96 = arith.constant 0 : index
    %360 = vector.load %arg12[%359, %c0_96] : memref<64x128xf32, #tpu.memory_space<vmem>>, vector<8x128xf32>
    %361 = arith.truncf %356 : vector<8x32xf32> to vector<8x32xbf16>
    %cst_97 = arith.constant dense<0.000000e+00> : vector<8x128xf32>
    %362 = tpu.matmul %361, %290, %cst_97 {dimension_numbers = #tpu.dot_dimension_numbers<[1], [0], [0], [1], [0, 0, 1, 1], [], []>} : vector<8x32xbf16>, vector<32x128xbf16>, vector<8x128xf32> -> vector<8x128xf32>
    %363 = arith.addf %360, %362 : vector<8x128xf32>
    %364 = vector.extract_strided_slice %363 {offsets = [0, 0], sizes = [8, 32], strides = [1, 1]} : vector<8x128xf32> to vector<8x32xf32>
    %365 = arith.negf %364 : vector<8x32xf32>
    %366 = math.exp %365 : vector<8x32xf32>
    %cst_98 = arith.constant 1.000000e+00 : f32
    %367 = vector.broadcast %cst_98 : f32 to vector<8x32xf32>
    %368 = arith.addf %367, %366 : vector<8x32xf32>
    %369 = arith.divf %367, %368 : vector<8x32xf32>
    %370 = vector.extract_strided_slice %363 {offsets = [0, 32], sizes = [8, 32], strides = [1, 1]} : vector<8x128xf32> to vector<8x32xf32>
    %371 = arith.negf %370 : vector<8x32xf32>
    %372 = math.exp %371 : vector<8x32xf32>
    %cst_99 = arith.constant 1.000000e+00 : f32
    %373 = vector.broadcast %cst_99 : f32 to vector<8x32xf32>
    %374 = arith.addf %373, %372 : vector<8x32xf32>
    %375 = arith.divf %373, %374 : vector<8x32xf32>
    %376 = vector.extract_strided_slice %363 {offsets = [0, 64], sizes = [8, 32], strides = [1, 1]} : vector<8x128xf32> to vector<8x32xf32>
    %377 = math.tanh %376 : vector<8x32xf32>
    %378 = vector.extract_strided_slice %363 {offsets = [0, 96], sizes = [8, 32], strides = [1, 1]} : vector<8x128xf32> to vector<8x32xf32>
    %379 = arith.negf %378 : vector<8x32xf32>
    %380 = math.exp %379 : vector<8x32xf32>
    %cst_100 = arith.constant 1.000000e+00 : f32
    %381 = vector.broadcast %cst_100 : f32 to vector<8x32xf32>
    %382 = arith.addf %381, %380 : vector<8x32xf32>
    %383 = arith.divf %381, %382 : vector<8x32xf32>
    %384 = arith.mulf %375, %354 : vector<8x32xf32>
    %385 = arith.mulf %369, %377 : vector<8x32xf32>
    %386 = arith.addf %384, %385 : vector<8x32xf32>
    %387 = math.tanh %386 : vector<8x32xf32>
    %388 = arith.mulf %383, %387 : vector<8x32xf32>
    %c3_i32_101 = arith.constant 3 : i32
    %c8_i32_102 = arith.constant 8 : i32
    %389 = arith.muli %c3_i32_101, %c8_i32_102 : i32
    %390 = tpu.assume_multiple %389, 8 : i32
    %391 = arith.index_cast %390 : i32 to index
    %c0_103 = arith.constant 0 : index
    %392 = vector.load %arg12[%391, %c0_103] : memref<64x128xf32, #tpu.memory_space<vmem>>, vector<8x128xf32>
    %393 = arith.truncf %388 : vector<8x32xf32> to vector<8x32xbf16>
    %cst_104 = arith.constant dense<0.000000e+00> : vector<8x128xf32>
    %394 = tpu.matmul %393, %290, %cst_104 {dimension_numbers = #tpu.dot_dimension_numbers<[1], [0], [0], [1], [0, 0, 1, 1], [], []>} : vector<8x32xbf16>, vector<32x128xbf16>, vector<8x128xf32> -> vector<8x128xf32>
    %395 = arith.addf %392, %394 : vector<8x128xf32>
    %396 = vector.extract_strided_slice %395 {offsets = [0, 0], sizes = [8, 32], strides = [1, 1]} : vector<8x128xf32> to vector<8x32xf32>
    %397 = arith.negf %396 : vector<8x32xf32>
    %398 = math.exp %397 : vector<8x32xf32>
    %cst_105 = arith.constant 1.000000e+00 : f32
    %399 = vector.broadcast %cst_105 : f32 to vector<8x32xf32>
    %400 = arith.addf %399, %398 : vector<8x32xf32>
    %401 = arith.divf %399, %400 : vector<8x32xf32>
    %402 = vector.extract_strided_slice %395 {offsets = [0, 32], sizes = [8, 32], strides = [1, 1]} : vector<8x128xf32> to vector<8x32xf32>
    %403 = arith.negf %402 : vector<8x32xf32>
    %404 = math.exp %403 : vector<8x32xf32>
    %cst_106 = arith.constant 1.000000e+00 : f32
    %405 = vector.broadcast %cst_106 : f32 to vector<8x32xf32>
    %406 = arith.addf %405, %404 : vector<8x32xf32>
    %407 = arith.divf %405, %406 : vector<8x32xf32>
    %408 = vector.extract_strided_slice %395 {offsets = [0, 64], sizes = [8, 32], strides = [1, 1]} : vector<8x128xf32> to vector<8x32xf32>
    %409 = math.tanh %408 : vector<8x32xf32>
    %410 = vector.extract_strided_slice %395 {offsets = [0, 96], sizes = [8, 32], strides = [1, 1]} : vector<8x128xf32> to vector<8x32xf32>
    %411 = arith.negf %410 : vector<8x32xf32>
    %412 = math.exp %411 : vector<8x32xf32>
    %cst_107 = arith.constant 1.000000e+00 : f32
    %413 = vector.broadcast %cst_107 : f32 to vector<8x32xf32>
    %414 = arith.addf %413, %412 : vector<8x32xf32>
    %415 = arith.divf %413, %414 : vector<8x32xf32>
    %416 = arith.mulf %407, %386 : vector<8x32xf32>
    %417 = arith.mulf %401, %409 : vector<8x32xf32>
    %418 = arith.addf %416, %417 : vector<8x32xf32>
    %419 = math.tanh %418 : vector<8x32xf32>
    %420 = arith.mulf %415, %419 : vector<8x32xf32>
    %c4_i32_108 = arith.constant 4 : i32
    %c8_i32_109 = arith.constant 8 : i32
    %421 = arith.muli %c4_i32_108, %c8_i32_109 : i32
    %422 = tpu.assume_multiple %421, 8 : i32
    %423 = arith.index_cast %422 : i32 to index
    %c0_110 = arith.constant 0 : index
    %424 = vector.load %arg12[%423, %c0_110] : memref<64x128xf32, #tpu.memory_space<vmem>>, vector<8x128xf32>
    %425 = arith.truncf %420 : vector<8x32xf32> to vector<8x32xbf16>
    %cst_111 = arith.constant dense<0.000000e+00> : vector<8x128xf32>
    %426 = tpu.matmul %425, %290, %cst_111 {dimension_numbers = #tpu.dot_dimension_numbers<[1], [0], [0], [1], [0, 0, 1, 1], [], []>} : vector<8x32xbf16>, vector<32x128xbf16>, vector<8x128xf32> -> vector<8x128xf32>
    %427 = arith.addf %424, %426 : vector<8x128xf32>
    %428 = vector.extract_strided_slice %427 {offsets = [0, 0], sizes = [8, 32], strides = [1, 1]} : vector<8x128xf32> to vector<8x32xf32>
    %429 = arith.negf %428 : vector<8x32xf32>
    %430 = math.exp %429 : vector<8x32xf32>
    %cst_112 = arith.constant 1.000000e+00 : f32
    %431 = vector.broadcast %cst_112 : f32 to vector<8x32xf32>
    %432 = arith.addf %431, %430 : vector<8x32xf32>
    %433 = arith.divf %431, %432 : vector<8x32xf32>
    %434 = vector.extract_strided_slice %427 {offsets = [0, 32], sizes = [8, 32], strides = [1, 1]} : vector<8x128xf32> to vector<8x32xf32>
    %435 = arith.negf %434 : vector<8x32xf32>
    %436 = math.exp %435 : vector<8x32xf32>
    %cst_113 = arith.constant 1.000000e+00 : f32
    %437 = vector.broadcast %cst_113 : f32 to vector<8x32xf32>
    %438 = arith.addf %437, %436 : vector<8x32xf32>
    %439 = arith.divf %437, %438 : vector<8x32xf32>
    %440 = vector.extract_strided_slice %427 {offsets = [0, 64], sizes = [8, 32], strides = [1, 1]} : vector<8x128xf32> to vector<8x32xf32>
    %441 = math.tanh %440 : vector<8x32xf32>
    %442 = vector.extract_strided_slice %427 {offsets = [0, 96], sizes = [8, 32], strides = [1, 1]} : vector<8x128xf32> to vector<8x32xf32>
    %443 = arith.negf %442 : vector<8x32xf32>
    %444 = math.exp %443 : vector<8x32xf32>
    %cst_114 = arith.constant 1.000000e+00 : f32
    %445 = vector.broadcast %cst_114 : f32 to vector<8x32xf32>
    %446 = arith.addf %445, %444 : vector<8x32xf32>
    %447 = arith.divf %445, %446 : vector<8x32xf32>
    %448 = arith.mulf %439, %418 : vector<8x32xf32>
    %449 = arith.mulf %433, %441 : vector<8x32xf32>
    %450 = arith.addf %448, %449 : vector<8x32xf32>
    %451 = math.tanh %450 : vector<8x32xf32>
    %452 = arith.mulf %447, %451 : vector<8x32xf32>
    %c5_i32_115 = arith.constant 5 : i32
    %c8_i32_116 = arith.constant 8 : i32
    %453 = arith.muli %c5_i32_115, %c8_i32_116 : i32
    %454 = tpu.assume_multiple %453, 8 : i32
    %455 = arith.index_cast %454 : i32 to index
    %c0_117 = arith.constant 0 : index
    %456 = vector.load %arg12[%455, %c0_117] : memref<64x128xf32, #tpu.memory_space<vmem>>, vector<8x128xf32>
    %457 = arith.truncf %452 : vector<8x32xf32> to vector<8x32xbf16>
    %cst_118 = arith.constant dense<0.000000e+00> : vector<8x128xf32>
    %458 = tpu.matmul %457, %290, %cst_118 {dimension_numbers = #tpu.dot_dimension_numbers<[1], [0], [0], [1], [0, 0, 1, 1], [], []>} : vector<8x32xbf16>, vector<32x128xbf16>, vector<8x128xf32> -> vector<8x128xf32>
    %459 = arith.addf %456, %458 : vector<8x128xf32>
    %460 = vector.extract_strided_slice %459 {offsets = [0, 0], sizes = [8, 32], strides = [1, 1]} : vector<8x128xf32> to vector<8x32xf32>
    %461 = arith.negf %460 : vector<8x32xf32>
    %462 = math.exp %461 : vector<8x32xf32>
    %cst_119 = arith.constant 1.000000e+00 : f32
    %463 = vector.broadcast %cst_119 : f32 to vector<8x32xf32>
    %464 = arith.addf %463, %462 : vector<8x32xf32>
    %465 = arith.divf %463, %464 : vector<8x32xf32>
    %466 = vector.extract_strided_slice %459 {offsets = [0, 32], sizes = [8, 32], strides = [1, 1]} : vector<8x128xf32> to vector<8x32xf32>
    %467 = arith.negf %466 : vector<8x32xf32>
    %468 = math.exp %467 : vector<8x32xf32>
    %cst_120 = arith.constant 1.000000e+00 : f32
    %469 = vector.broadcast %cst_120 : f32 to vector<8x32xf32>
    %470 = arith.addf %469, %468 : vector<8x32xf32>
    %471 = arith.divf %469, %470 : vector<8x32xf32>
    %472 = vector.extract_strided_slice %459 {offsets = [0, 64], sizes = [8, 32], strides = [1, 1]} : vector<8x128xf32> to vector<8x32xf32>
    %473 = math.tanh %472 : vector<8x32xf32>
    %474 = vector.extract_strided_slice %459 {offsets = [0, 96], sizes = [8, 32], strides = [1, 1]} : vector<8x128xf32> to vector<8x32xf32>
    %475 = arith.negf %474 : vector<8x32xf32>
    %476 = math.exp %475 : vector<8x32xf32>
    %cst_121 = arith.constant 1.000000e+00 : f32
    %477 = vector.broadcast %cst_121 : f32 to vector<8x32xf32>
    %478 = arith.addf %477, %476 : vector<8x32xf32>
    %479 = arith.divf %477, %478 : vector<8x32xf32>
    %480 = arith.mulf %471, %450 : vector<8x32xf32>
    %481 = arith.mulf %465, %473 : vector<8x32xf32>
    %482 = arith.addf %480, %481 : vector<8x32xf32>
    %483 = math.tanh %482 : vector<8x32xf32>
    %484 = arith.mulf %479, %483 : vector<8x32xf32>
    %c6_i32_122 = arith.constant 6 : i32
    %c8_i32_123 = arith.constant 8 : i32
    %485 = arith.muli %c6_i32_122, %c8_i32_123 : i32
    %486 = tpu.assume_multiple %485, 8 : i32
    %487 = arith.index_cast %486 : i32 to index
    %c0_124 = arith.constant 0 : index
    %488 = vector.load %arg12[%487, %c0_124] : memref<64x128xf32, #tpu.memory_space<vmem>>, vector<8x128xf32>
    %489 = arith.truncf %484 : vector<8x32xf32> to vector<8x32xbf16>
    %cst_125 = arith.constant dense<0.000000e+00> : vector<8x128xf32>
    %490 = tpu.matmul %489, %290, %cst_125 {dimension_numbers = #tpu.dot_dimension_numbers<[1], [0], [0], [1], [0, 0, 1, 1], [], []>} : vector<8x32xbf16>, vector<32x128xbf16>, vector<8x128xf32> -> vector<8x128xf32>
    %491 = arith.addf %488, %490 : vector<8x128xf32>
    %492 = vector.extract_strided_slice %491 {offsets = [0, 0], sizes = [8, 32], strides = [1, 1]} : vector<8x128xf32> to vector<8x32xf32>
    %493 = arith.negf %492 : vector<8x32xf32>
    %494 = math.exp %493 : vector<8x32xf32>
    %cst_126 = arith.constant 1.000000e+00 : f32
    %495 = vector.broadcast %cst_126 : f32 to vector<8x32xf32>
    %496 = arith.addf %495, %494 : vector<8x32xf32>
    %497 = arith.divf %495, %496 : vector<8x32xf32>
    %498 = vector.extract_strided_slice %491 {offsets = [0, 32], sizes = [8, 32], strides = [1, 1]} : vector<8x128xf32> to vector<8x32xf32>
    %499 = arith.negf %498 : vector<8x32xf32>
    %500 = math.exp %499 : vector<8x32xf32>
    %cst_127 = arith.constant 1.000000e+00 : f32
    %501 = vector.broadcast %cst_127 : f32 to vector<8x32xf32>
    %502 = arith.addf %501, %500 : vector<8x32xf32>
    %503 = arith.divf %501, %502 : vector<8x32xf32>
    %504 = vector.extract_strided_slice %491 {offsets = [0, 64], sizes = [8, 32], strides = [1, 1]} : vector<8x128xf32> to vector<8x32xf32>
    %505 = math.tanh %504 : vector<8x32xf32>
    %506 = vector.extract_strided_slice %491 {offsets = [0, 96], sizes = [8, 32], strides = [1, 1]} : vector<8x128xf32> to vector<8x32xf32>
    %507 = arith.negf %506 : vector<8x32xf32>
    %508 = math.exp %507 : vector<8x32xf32>
    %cst_128 = arith.constant 1.000000e+00 : f32
    %509 = vector.broadcast %cst_128 : f32 to vector<8x32xf32>
    %510 = arith.addf %509, %508 : vector<8x32xf32>
    %511 = arith.divf %509, %510 : vector<8x32xf32>
    %512 = arith.mulf %503, %482 : vector<8x32xf32>
    %513 = arith.mulf %497, %505 : vector<8x32xf32>
    %514 = arith.addf %512, %513 : vector<8x32xf32>
    %515 = math.tanh %514 : vector<8x32xf32>
    %516 = arith.mulf %511, %515 : vector<8x32xf32>
    %c7_i32_129 = arith.constant 7 : i32
    %c8_i32_130 = arith.constant 8 : i32
    %517 = arith.muli %c7_i32_129, %c8_i32_130 : i32
    %518 = tpu.assume_multiple %517, 8 : i32
    %519 = arith.index_cast %518 : i32 to index
    %c0_131 = arith.constant 0 : index
    %520 = vector.load %arg12[%519, %c0_131] : memref<64x128xf32, #tpu.memory_space<vmem>>, vector<8x128xf32>
    %521 = arith.truncf %516 : vector<8x32xf32> to vector<8x32xbf16>
    %cst_132 = arith.constant dense<0.000000e+00> : vector<8x128xf32>
    %522 = tpu.matmul %521, %290, %cst_132 {dimension_numbers = #tpu.dot_dimension_numbers<[1], [0], [0], [1], [0, 0, 1, 1], [], []>} : vector<8x32xbf16>, vector<32x128xbf16>, vector<8x128xf32> -> vector<8x128xf32>
    %523 = arith.addf %520, %522 : vector<8x128xf32>
    %524 = vector.extract_strided_slice %523 {offsets = [0, 0], sizes = [8, 32], strides = [1, 1]} : vector<8x128xf32> to vector<8x32xf32>
    %525 = arith.negf %524 : vector<8x32xf32>
    %526 = math.exp %525 : vector<8x32xf32>
    %cst_133 = arith.constant 1.000000e+00 : f32
    %527 = vector.broadcast %cst_133 : f32 to vector<8x32xf32>
    %528 = arith.addf %527, %526 : vector<8x32xf32>
    %529 = arith.divf %527, %528 : vector<8x32xf32>
    %530 = vector.extract_strided_slice %523 {offsets = [0, 32], sizes = [8, 32], strides = [1, 1]} : vector<8x128xf32> to vector<8x32xf32>
    %531 = arith.negf %530 : vector<8x32xf32>
    %532 = math.exp %531 : vector<8x32xf32>
    %cst_134 = arith.constant 1.000000e+00 : f32
    %533 = vector.broadcast %cst_134 : f32 to vector<8x32xf32>
    %534 = arith.addf %533, %532 : vector<8x32xf32>
    %535 = arith.divf %533, %534 : vector<8x32xf32>
    %536 = vector.extract_strided_slice %523 {offsets = [0, 64], sizes = [8, 32], strides = [1, 1]} : vector<8x128xf32> to vector<8x32xf32>
    %537 = math.tanh %536 : vector<8x32xf32>
    %538 = vector.extract_strided_slice %523 {offsets = [0, 96], sizes = [8, 32], strides = [1, 1]} : vector<8x128xf32> to vector<8x32xf32>
    %539 = arith.negf %538 : vector<8x32xf32>
    %540 = math.exp %539 : vector<8x32xf32>
    %cst_135 = arith.constant 1.000000e+00 : f32
    %541 = vector.broadcast %cst_135 : f32 to vector<8x32xf32>
    %542 = arith.addf %541, %540 : vector<8x32xf32>
    %543 = arith.divf %541, %542 : vector<8x32xf32>
    %544 = arith.mulf %535, %514 : vector<8x32xf32>
    %545 = arith.mulf %529, %537 : vector<8x32xf32>
    %546 = arith.addf %544, %545 : vector<8x32xf32>
    %547 = math.tanh %546 : vector<8x32xf32>
    %548 = arith.mulf %543, %547 : vector<8x32xf32>
    %c8_i32_136 = arith.constant 8 : i32
    %549 = arith.truncf %548 : vector<8x32xf32> to vector<8x32xbf16>
    %c0_137 = arith.constant 0 : index
    %c0_138 = arith.constant 0 : index
    %550 = vector.load %arg7[%c0_137, %c0_138] : memref<32x16xbf16, #tpu.memory_space<vmem>>, vector<32x16xbf16>
    %cst_139 = arith.constant dense<0.000000e+00> : vector<8x16xf32>
    %551 = tpu.matmul %549, %550, %cst_139 {dimension_numbers = #tpu.dot_dimension_numbers<[1], [0], [0], [1], [0, 0, 1, 1], [], []>} : vector<8x32xbf16>, vector<32x16xbf16>, vector<8x16xf32> -> vector<8x16xf32>
    %c0_140 = arith.constant 0 : index
    %c0_141 = arith.constant 0 : index
    %552 = vector.load %arg8[%c0_140, %c0_141] : memref<1x16xf32, #tpu.memory_space<vmem>>, vector<1x16xf32>
    %553 = vector.broadcast %552 : vector<1x16xf32> to vector<8x16xf32>
    %554 = arith.addf %551, %553 : vector<8x16xf32>
    %cst_142 = arith.constant 0.000000e+00 : f32
    %555 = vector.broadcast %cst_142 : f32 to vector<8x16xf32>
    %556 = arith.maximumf %554, %555 : vector<8x16xf32>
    %557 = arith.truncf %556 : vector<8x16xf32> to vector<8x16xbf16>
    %c0_143 = arith.constant 0 : index
    %c0_144 = arith.constant 0 : index
    %558 = vector.load %arg9[%c0_143, %c0_144] : memref<16x4xbf16, #tpu.memory_space<vmem>>, vector<16x4xbf16>
    %cst_145 = arith.constant dense<0.000000e+00> : vector<8x4xf32>
    %559 = tpu.matmul %557, %558, %cst_145 {dimension_numbers = #tpu.dot_dimension_numbers<[1], [0], [0], [1], [0, 0, 1, 1], [], []>} : vector<8x16xbf16>, vector<16x4xbf16>, vector<8x4xf32> -> vector<8x4xf32>
    %c0_146 = arith.constant 0 : index
    %c0_147 = arith.constant 0 : index
    %560 = vector.load %arg10[%c0_146, %c0_147] : memref<1x4xf32, #tpu.memory_space<vmem>>, vector<1x4xf32>
    %561 = vector.broadcast %560 : vector<1x4xf32> to vector<8x4xf32>
    %562 = arith.addf %559, %561 : vector<8x4xf32>
    %c0_148 = arith.constant 0 : index
    %c0_149 = arith.constant 0 : index
    %563 = vector.load %arg11[%c0_148, %c0_149] : memref<8x4xf32, #tpu.memory_space<vmem>>, vector<8x4xf32>
    tpu.vector_store %arg11[%c0_148, %c0_149], %562 {strides = array<i32>} : memref<8x4xf32, #tpu.memory_space<vmem>>, vector<8x4xf32>,
    return
  }
}

</mosaic_0001>

<llo_original>
// kernel: sensitivity_lstm_forward.1
$region0: #{sensitivity_lstm_forward.1}
  #allocation0 [shape = 'u32[]', space=smem, size = 0x4, offset = 0x4, fixed_abs, tag = 'smem constant byte address 0x4 - core index']
  #allocation1 [shape = 'u32[72,128]{1,0:T(1,128)}', space=vmem, size = 0x9000, scoped, tag = 'internal scratch']
  #allocation2 [shape = 'f32[64,128]{1,0:T(8,128)}', space=vmem, size = 0x8000, scoped, tag = 'scratch operand']
  #allocation3 [shape = 'f32[64,32]{1,0:T(8,128)}', space=vmem, size = 0x8000, scoped, tag = 'scratch operand']
  %s0 = inlined_call_operand.vmem [shape: bf16[64,16], index: 0, kind: input, shape index: {}]
  %s1 = inlined_call_operand.vmem [shape: bf16[16,128], index: 1, kind: input, shape index: {}]
  %s2 = inlined_call_operand.vmem [shape: bf16[32,128], index: 2, kind: input, shape index: {}]
  %s3 = inlined_call_operand.vmem [shape: f32[1,128], index: 3, kind: input, shape index: {}]
  %s4 = inlined_call_operand.vmem [shape: bf16[32,128], index: 4, kind: input, shape index: {}]
  %s5 = inlined_call_operand.vmem [shape: bf16[32,128], index: 5, kind: input, shape index: {}]
  %s6 = inlined_call_operand.vmem [shape: f32[1,128], index: 6, kind: input, shape index: {}]
  %s7 = inlined_call_operand.vmem [shape: bf16[32,16], index: 7, kind: input, shape index: {}]
  %s8 = inlined_call_operand.vmem [shape: f32[1,16], index: 8, kind: input, shape index: {}]
  %s9 = inlined_call_operand.vmem [shape: bf16[16,4], index: 9, kind: input, shape index: {}]
  %s10 = inlined_call_operand.vmem [shape: f32[1,4], index: 10, kind: input, shape index: {}]
  %s11 = inlined_call_operand.vmem [shape: f32[8,4], index: 11, kind: output, shape index: {}]
  %s12 = sld [smem:[#allocation0]]
  $region54: #{sensitivity_lstm_forward.1} parent=0
    _
  %s14 = ssub.s32 1, %s12
  %s15 = scalar_select 0, %s14, %s12
  // Predicated region
  $region2: #{sensitivity_lstm_forward.1} parent=0 // pred_check
    _
  $region3: #{sensitivity_lstm_forward.1} parent=0 // pred_check_branch
    %17 = sbr.rel (0) target = $region5
  $region4: #{sensitivity_lstm_forward.1} parent=0 // pred_region
    _
  $region5: #{sensitivity_lstm_forward.1} parent=0 // pred_fallthru
    _
  // Predicated region
  $region6: #{sensitivity_lstm_forward.1} parent=0 // pred_check
    _
  $region7: #{sensitivity_lstm_forward.1} parent=0 // pred_check_branch
    %19 = sbr.rel (0) target = $region9
  $region8: #{sensitivity_lstm_forward.1} parent=0 // pred_region
    _
  $region9: #{sensitivity_lstm_forward.1} parent=0 // pred_fallthru
    _
  // Predicated region
  $region10: #{sensitivity_lstm_forward.1} parent=0 // pred_check
    _
  $region11: #{sensitivity_lstm_forward.1} parent=0 // pred_check_branch
    %21 = sbr.rel (0) target = $region13
  $region12: #{sensitivity_lstm_forward.1} parent=0 // pred_region
    _
  $region13: #{sensitivity_lstm_forward.1} parent=0 // pred_fallthru
    _
  // Predicated region
  $region14: #{sensitivity_lstm_forward.1} parent=0 // pred_check
    _
  $region15: #{sensitivity_lstm_forward.1} parent=0 // pred_check_branch
    %23 = sbr.rel (0) target = $region17
  $region16: #{sensitivity_lstm_forward.1} parent=0 // pred_region
    _
  $region17: #{sensitivity_lstm_forward.1} parent=0 // pred_fallthru
    _
  // Predicated region
  $region18: #{sensitivity_lstm_forward.1} parent=0 // pred_check
    _
  $region19: #{sensitivity_lstm_forward.1} parent=0 // pred_check_branch
    %25 = sbr.rel (0) target = $region21
  $region20: #{sensitivity_lstm_forward.1} parent=0 // pred_region
    _
  $region21: #{sensitivity_lstm_forward.1} parent=0 // pred_fallthru
    _
  // Predicated region
  $region22: #{sensitivity_lstm_forward.1} parent=0 // pred_check
    _
  $region23: #{sensitivity_lstm_forward.1} parent=0 // pred_check_branch
    %27 = sbr.rel (0) target = $region25
  $region24: #{sensitivity_lstm_forward.1} parent=0 // pred_region
    _
  $region25: #{sensitivity_lstm_forward.1} parent=0 // pred_fallthru
    _
  // Predicated region
  $region26: #{sensitivity_lstm_forward.1} parent=0 // pred_check
    _
  $region27: #{sensitivity_lstm_forward.1} parent=0 // pred_check_branch
    %29 = sbr.rel (0) target = $region29
  $region28: #{sensitivity_lstm_forward.1} parent=0 // pred_region
    _
  $region29: #{sensitivity_lstm_forward.1} parent=0 // pred_fallthru
    _
  // Predicated region
  $region30: #{sensitivity_lstm_forward.1} parent=0 // pred_check
    _
  $region31: #{sensitivity_lstm_forward.1} parent=0 // pred_check_branch
    %31 = sbr.rel (0) target = $region33
  $region32: #{sensitivity_lstm_forward.1} parent=0 // pred_region
    _
  $region33: #{sensitivity_lstm_forward.1} parent=0 // pred_fallthru
    _
  // Predicated region
  $region34: #{sensitivity_lstm_forward.1} parent=0 // pred_check
    _
  $region35: #{sensitivity_lstm_forward.1} parent=0 // pred_check_branch
    %33 = sbr.rel (0) target = $region37
  $region36: #{sensitivity_lstm_forward.1} parent=0 // pred_region
    _
  $region37: #{sensitivity_lstm_forward.1} parent=0 // pred_fallthru
    _
  // Predicated region
  $region38: #{sensitivity_lstm_forward.1} parent=0 // pred_check
    _
  $region39: #{sensitivity_lstm_forward.1} parent=0 // pred_check_branch
    %35 = sbr.rel (0) target = $region41
  $region40: #{sensitivity_lstm_forward.1} parent=0 // pred_region
    _
  $region41: #{sensitivity_lstm_forward.1} parent=0 // pred_fallthru
    _
  // Predicated region
  $region42: #{sensitivity_lstm_forward.1} parent=0 // pred_check
    _
  $region43: #{sensitivity_lstm_forward.1} parent=0 // pred_check_branch
    %37 = sbr.rel (0) target = $region45
  $region44: #{sensitivity_lstm_forward.1} parent=0 // pred_region
    _
  $region45: #{sensitivity_lstm_forward.1} parent=0 // pred_fallthru
    _
  %v39 = vld [vmem:[%s0] sm:$0xf]
  %v40 = vld [vmem:[%s0 + $0x4] sm:$0xf]
  %v41 = vld [vmem:[%s0 + $0x8] sm:$0xf]
  %v42 = vld [vmem:[%s0 + $0xc] sm:$0xf]
  %v43 = vld [vmem:[%s0 + $0x10] sm:$0xf]
  %v44 = vld [vmem:[%s0 + $0x14] sm:$0xf]
  %v45 = vld [vmem:[%s0 + $0x18] sm:$0xf]
  %v46 = vld [vmem:[%s0 + $0x1c] sm:$0xf]
  %v47 = vld [vmem:[%s1] sm:$0xf]
  %v48 = vld [vmem:[%s1 + $0x4] sm:$0xf]
  %v49 = vld [vmem:[%s3] sm:$0x1]
  %v51 = vperm.slane %v49, 0
  %v61 = vunpack.c.l.b16 %v39
  %v62 = vunpack.c.l.b16 %v40
  %v63 = vunpack.c.l.b16 %v41
  %v64 = vunpack.c.l.b16 %v42
  %v65 = vunpack.c.l.b16 %v43
  %v66 = vunpack.c.l.b16 %v44
  %v67 = vunpack.c.l.b16 %v45
  %v68 = vunpack.c.l.b16 %v46
  %v69 = vpack.c.b16 %v62, %v61
  %v70 = vpack.c.b16 %v64, %v63
  %v71 = vpack.c.b16 %v66, %v65
  %v72 = vpack.c.b16 %v68, %v67
  %v75 = vunpack.c.l.b16 %v47
  %v76 = vunpack.c.l.b16 %v48
  %v77 = vpack.c.b16 %v76, %v75
  %vm79 = vcmask 130048
  %v81 = vsel %vm79, %v69, 0
  %v84 = vsel %vm79, %v70, 0
  %v87 = vsel %vm79, %v71, 0
  %v90 = vsel %vm79, %v72, 0
  %92 = vmatpush.bf16.msra.mxu0 0
  %93 = vmatpush.bf16.msra.mxu0 0
  %94 = vmatpush.bf16.msra.mxu0 0
  %95 = vmatpush.bf16.msra.mxu0 0
  %96 = vmatpush.bf16.msra.mxu0 0
  %97 = vmatpush.bf16.msra.mxu0 0
  %98 = vmatpush.bf16.msra.mxu0 0
  %99 = vmatpush.bf16.msra.mxu0 %v77
  %100 = vmatmul.bf16.gmra.mxu0 %v81
  %v101 = vpop.f32.mrf.mxu0
  %v102 = vadd.f32 %v51, %v101
  %v103 = vpop.f32.mrf.mxu0
  %v104 = vadd.f32 %v51, %v103
  %105 = vmatmul.bf16.gmra.mxu0 %v84
  %v106 = vpop.f32.mrf.mxu0
  %v107 = vadd.f32 %v51, %v106
  %v108 = vpop.f32.mrf.mxu0
  %v109 = vadd.f32 %v51, %v108
  %110 = vmatmul.bf16.gmra.mxu0 %v87
  %v111 = vpop.f32.mrf.mxu0
  %v112 = vadd.f32 %v51, %v111
  %v113 = vpop.f32.mrf.mxu0
  %v114 = vadd.f32 %v51, %v113
  %115 = vmatmul.bf16.gmra.mxu0 %v90
  %v116 = vpop.f32.mrf.mxu0
  %v117 = vadd.f32 %v51, %v116
  %v118 = vpop.f32.mrf.mxu0
  %v119 = vadd.f32 %v51, %v118
  %120 = vdwg.mxu0
  %121 = vst [vmem:[#allocation2] sm:$0xff] %v102
  %122 = vst [vmem:[#allocation2 + $0x8] sm:$0xff] %v104
  %123 = vst [vmem:[#allocation2 + $0x10] sm:$0xff] %v107
  %124 = vst [vmem:[#allocation2 + $0x18] sm:$0xff] %v109
  %125 = vst [vmem:[#allocation2 + $0x20] sm:$0xff] %v112
  %126 = vst [vmem:[#allocation2 + $0x28] sm:$0xff] %v114
  %127 = vst [vmem:[#allocation2 + $0x30] sm:$0xff] %v117
  %128 = vst [vmem:[#allocation2 + $0x38] sm:$0xff] %v119
  %v129 = vld [vmem:[%s2] sm:$0xf]
  %v130 = vld [vmem:[%s2 + $0x4] sm:$0xf]
  %v131 = vld [vmem:[%s2 + $0x8] sm:$0xf]
  %v132 = vld [vmem:[%s2 + $0xc] sm:$0xf]
  %v133 = vld [vmem:[#allocation2] sm:$0xff]
  %v138 = vunpack.c.l.b16 %v129
  %v139 = vunpack.c.l.b16 %v130
  %v140 = vunpack.c.l.b16 %v131
  %v141 = vunpack.c.l.b16 %v132
  %v142 = vpack.c.b16 %v139, %v138
  %v143 = vpack.c.b16 %v141, %v140
  %vm146 = vcmask 261120
  %v148 = vsel %vm146, 0, 0
  %150 = vmatpush.bf16.msra.mxu0 0
  %151 = vmatpush.bf16.msra.mxu0 0
  %152 = vmatpush.bf16.msra.mxu0 0
  %153 = vmatpush.bf16.msra.mxu0 0
  %154 = vmatpush.bf16.msra.mxu0 0
  %155 = vmatpush.bf16.msra.mxu0 0
  %156 = vmatpush.bf16.msra.mxu0 %v143
  %157 = vmatpush.bf16.msra.mxu0 %v142
  %158 = vmatmul.bf16.gmra.mxu0 %v148
  %v159 = vpop.f32.mrf.mxu0
  %v160 = vadd.f32 0.0, %v159
  %v161 = vpop.f32.mrf.mxu0
  %162 = vdwg.mxu0
  %v163 = vadd.f32 %v133, %v160
  %v164 = vxor.u32 %v163, 2147483648
  %v165 = vmul.f32 %v164, 1.442695
  %v166 = vpow.pop %v165
  %v167 = vadd.f32 %v166, 1.0
  %v168 = vrcp.pop %v167
  %v169 = vmul.f32 %v167, %v168
  %v170 = vsub.f32 1.0, %v169
  %v171 = vmul.f32 %v168, %v170
  %v172 = vadd.f32 %v168, %v171
  %vm173 = vweird.f32 %v167
  %vm174 = vweird.f32 %v168
  %vm175 = vmor %vm173, %vm174
  %v176 = vsel %vm175, %v168, %v172
  %v177 = vand.u32 2147483647, %v167
  %vm178 = vcmp.eq.f32.partialorder %v177, 8.507059e+37
  %v179 = vand.u32 %v167, 2147483648
  %v180 = vor.u32 1.1754944e-38, %v179
  %v181 = vsel %vm178, %v180, %v176
  %v182 = vmul.f32 1.0, %v181
  %v183 = vtanh.pop %v163
  %v184 = vmul.f32 %v182, 0.0
  %186 = vrot.lane.b32.xlu0 %v183, 64
  %v187 = vpop.permute.xlu0 %186
  %v189 = vmul.f32 %v182, %v187
  %191 = vrot.lane.b32.xlu0 %v189, 32
  %v192 = vpop.permute.xlu0 %191
  %v194 = vadd.f32 %v184, %v192
  %v195 = vtanh.pop %v194
  %197 = vrot.lane.b32.xlu0 %v195, 64
  %v198 = vpop.permute.xlu0 %197
  %v200 = vmul.f32 %v182, %v198
  %202 = vrot.lane.b32.xlu0 %v200, 32
  %v203 = vpop.permute.xlu0 %202
  %205 = vst.msk [vmem:[#allocation3] sm:$0xff] %vm146, %v203
  %s206 = scalar_lea.vmem [#allocation2], 8
  %v207 = vld [vmem:[%s206] sm:$0xff]
  %v208 = vpack.c.bf16 %v200, %v200
  %210 = vrot.lane.b32.xlu0 %v208, 32
  %v211 = vpop.permute.xlu0 %210
  %v213 = vsel %vm146, %v211, 0
  %215 = vmatpush.bf16.msra.mxu0 0
  %216 = vmatpush.bf16.msra.mxu0 0
  %217 = vmatpush.bf16.msra.mxu0 0
  %218 = vmatpush.bf16.msra.mxu0 0
  %219 = vmatpush.bf16.msra.mxu0 0
  %220 = vmatpush.bf16.msra.mxu0 0
  %221 = vmatpush.bf16.msra.mxu0 %v143
  %222 = vmatpush.bf16.msra.mxu0 %v142
  %223 = vmatmul.bf16.gmra.mxu0 %v213
  %v224 = vpop.f32.mrf.mxu0
  %v225 = vadd.f32 0.0, %v224
  %v226 = vpop.f32.mrf.mxu0
  %227 = vdwg.mxu0
  %v228 = vadd.f32 %v207, %v225
  %v229 = vxor.u32 %v228, 2147483648
  %v230 = vmul.f32 %v229, 1.442695
  %v231 = vpow.pop %v230
  %v232 = vadd.f32 %v231, 1.0
  %v233 = vrcp.pop %v232
  %v234 = vmul.f32 %v232, %v233
  %v235 = vsub.f32 1.0, %v234
  %v236 = vmul.f32 %v233, %v235
  %v237 = vadd.f32 %v233, %v236
  %vm238 = vweird.f32 %v232
  %vm239 = vweird.f32 %v233
  %vm240 = vmor %vm238, %vm239
  %v241 = vsel %vm240, %v233, %v237
  %v242 = vand.u32 2147483647, %v232
  %vm243 = vcmp.eq.f32.partialorder %v242, 8.507059e+37
  %v244 = vand.u32 %v232, 2147483648
  %v245 = vor.u32 1.1754944e-38, %v244
  %v246 = vsel %vm243, %v245, %v241
  %v247 = vmul.f32 1.0, %v246
  %v248 = vtanh.pop %v228
  %v249 = vmul.f32 %v247, %v194
  %251 = vrot.lane.b32.xlu0 %v248, 64
  %v252 = vpop.permute.xlu0 %251
  %v254 = vmul.f32 %v247, %v252
  %256 = vrot.lane.b32.xlu0 %v254, 32
  %v257 = vpop.permute.xlu0 %256
  %v259 = vadd.f32 %v249, %v257
  %v260 = vtanh.pop %v259
  %262 = vrot.lane.b32.xlu0 %v260, 64
  %v263 = vpop.permute.xlu0 %262
  %v265 = vmul.f32 %v247, %v263
  %267 = vrot.lane.b32.xlu0 %v265, 32
  %v268 = vpop.permute.xlu0 %267
  %s270 = scalar_lea.vmem [#allocation3], 8
  %271 = vst.msk [vmem:[%s270] sm:$0xff] %vm146, %v268
  %s272 = scalar_lea.vmem [#allocation2], 16
  %v273 = vld [vmem:[%s272] sm:$0xff]
  %v274 = vpack.c.bf16 %v265, %v265
  %276 = vrot.lane.b32.xlu0 %v274, 32
  %v277 = vpop.permute.xlu0 %276
  %v279 = vsel %vm146, %v277, 0
  %281 = vmatpush.bf16.msra.mxu0 0
  %282 = vmatpush.bf16.msra.mxu0 0
  %283 = vmatpush.bf16.msra.mxu0 0
  %284 = vmatpush.bf16.msra.mxu0 0
  %285 = vmatpush.bf16.msra.mxu0 0
  %286 = vmatpush.bf16.msra.mxu0 0
  %287 = vmatpush.bf16.msra.mxu0 %v143
  %288 = vmatpush.bf16.msra.mxu0 %v142
  %289 = vmatmul.bf16.gmra.mxu0 %v279
  %v290 = vpop.f32.mrf.mxu0
  %v291 = vadd.f32 0.0, %v290
  %v292 = vpop.f32.mrf.mxu0
  %293 = vdwg.mxu0
  %v294 = vadd.f32 %v273, %v291
  %v295 = vxor.u32 %v294, 2147483648
  %v296 = vmul.f32 %v295, 1.442695
  %v297 = vpow.pop %v296
  %v298 = vadd.f32 %v297, 1.0
  %v299 = vrcp.pop %v298
  %v300 = vmul.f32 %v298, %v299
  %v301 = vsub.f32 1.0, %v300
  %v302 = vmul.f32 %v299, %v301
  %v303 = vadd.f32 %v299, %v302
  %vm304 = vweird.f32 %v298
  %vm305 = vweird.f32 %v299
  %vm306 = vmor %vm304, %vm305
  %v307 = vsel %vm306, %v299, %v303
  %v308 = vand.u32 2147483647, %v298
  %vm309 = vcmp.eq.f32.partialorder %v308, 8.507059e+37
  %v310 = vand.u32 %v298, 2147483648
  %v311 = vor.u32 1.1754944e-38, %v310
  %v312 = vsel %vm309, %v311, %v307
  %v313 = vmul.f32 1.0, %v312
  %v314 = vtanh.pop %v294
  %v315 = vmul.f32 %v313, %v259
  %317 = vrot.lane.b32.xlu0 %v314, 64
  %v318 = vpop.permute.xlu0 %317
  %v320 = vmul.f32 %v313, %v318
  %322 = vrot.lane.b32.xlu0 %v320, 32
  %v323 = vpop.permute.xlu0 %322
  %v325 = vadd.f32 %v315, %v323
  %v326 = vtanh.pop %v325
  %328 = vrot.lane.b32.xlu0 %v326, 64
  %v329 = vpop.permute.xlu0 %328
  %v331 = vmul.f32 %v313, %v329
  %333 = vrot.lane.b32.xlu0 %v331, 32
  %v334 = vpop.permute.xlu0 %333
  %s336 = scalar_lea.vmem [#allocation3], 16
  %337 = vst.msk [vmem:[%s336] sm:$0xff] %vm146, %v334
  %s338 = scalar_lea.vmem [#allocation2], 24
  %v339 = vld [vmem:[%s338] sm:$0xff]
  %v340 = vpack.c.bf16 %v331, %v331
  %342 = vrot.lane.b32.xlu0 %v340, 32
  %v343 = vpop.permute.xlu0 %342
  %v345 = vsel %vm146, %v343, 0
  %347 = vmatpush.bf16.msra.mxu0 0
  %348 = vmatpush.bf16.msra.mxu0 0
  %349 = vmatpush.bf16.msra.mxu0 0
  %350 = vmatpush.bf16.msra.mxu0 0
  %351 = vmatpush.bf16.msra.mxu0 0
  %352 = vmatpush.bf16.msra.mxu0 0
  %353 = vmatpush.bf16.msra.mxu0 %v143
  %354 = vmatpush.bf16.msra.mxu0 %v142
  %355 = vmatmul.bf16.gmra.mxu0 %v345
  %v356 = vpop.f32.mrf.mxu0
  %v357 = vadd.f32 0.0, %v356
  %v358 = vpop.f32.mrf.mxu0
  %359 = vdwg.mxu0
  %v360 = vadd.f32 %v339, %v357
  %v361 = vxor.u32 %v360, 2147483648
  %v362 = vmul.f32 %v361, 1.442695
  %v363 = vpow.pop %v362
  %v364 = vadd.f32 %v363, 1.0
  %v365 = vrcp.pop %v364
  %v366 = vmul.f32 %v364, %v365
  %v367 = vsub.f32 1.0, %v366
  %v368 = vmul.f32 %v365, %v367
  %v369 = vadd.f32 %v365, %v368
  %vm370 = vweird.f32 %v364
  %vm371 = vweird.f32 %v365
  %vm372 = vmor %vm370, %vm371
  %v373 = vsel %vm372, %v365, %v369
  %v374 = vand.u32 2147483647, %v364
  %vm375 = vcmp.eq.f32.partialorder %v374, 8.507059e+37
  %v376 = vand.u32 %v364, 2147483648
  %v377 = vor.u32 1.1754944e-38, %v376
  %v378 = vsel %vm375, %v377, %v373
  %v379 = vmul.f32 1.0, %v378
  %v380 = vtanh.pop %v360
  %v381 = vmul.f32 %v379, %v325
  %383 = vrot.lane.b32.xlu0 %v380, 64
  %v384 = vpop.permute.xlu0 %383
  %v386 = vmul.f32 %v379, %v384
  %388 = vrot.lane.b32.xlu0 %v386, 32
  %v389 = vpop.permute.xlu0 %388
  %v391 = vadd.f32 %v381, %v389
  %v392 = vtanh.pop %v391
  %394 = vrot.lane.b32.xlu0 %v392, 64
  %v395 = vpop.permute.xlu0 %394
  %v397 = vmul.f32 %v379, %v395
  %399 = vrot.lane.b32.xlu0 %v397, 32
  %v400 = vpop.permute.xlu0 %399
  %s402 = scalar_lea.vmem [#allocation3], 24
  %403 = vst.msk [vmem:[%s402] sm:$0xff] %vm146, %v400
  %s404 = scalar_lea.vmem [#allocation2], 32
  %v405 = vld [vmem:[%s404] sm:$0xff]
  %v406 = vpack.c.bf16 %v397, %v397
  %408 = vrot.lane.b32.xlu0 %v406, 32
  %v409 = vpop.permute.xlu0 %408
  %v411 = vsel %vm146, %v409, 0
  %413 = vmatpush.bf16.msra.mxu0 0
  %414 = vmatpush.bf16.msra.mxu0 0
  %415 = vmatpush.bf16.msra.mxu0 0
  %416 = vmatpush.bf16.msra.mxu0 0
  %417 = vmatpush.bf16.msra.mxu0 0
  %418 = vmatpush.bf16.msra.mxu0 0
  %419 = vmatpush.bf16.msra.mxu0 %v143
  %420 = vmatpush.bf16.msra.mxu0 %v142
  %421 = vmatmul.bf16.gmra.mxu0 %v411
  %v422 = vpop.f32.mrf.mxu0
  %v423 = vadd.f32 0.0, %v422
  %v424 = vpop.f32.mrf.mxu0
  %425 = vdwg.mxu0
  %v426 = vadd.f32 %v405, %v423
  %v427 = vxor.u32 %v426, 2147483648
  %v428 = vmul.f32 %v427, 1.442695
  %v429 = vpow.pop %v428
  %v430 = vadd.f32 %v429, 1.0
  %v431 = vrcp.pop %v430
  %v432 = vmul.f32 %v430, %v431
  %v433 = vsub.f32 1.0, %v432
  %v434 = vmul.f32 %v431, %v433
  %v435 = vadd.f32 %v431, %v434
  %vm436 = vweird.f32 %v430
  %vm437 = vweird.f32 %v431
  %vm438 = vmor %vm436, %vm437
  %v439 = vsel %vm438, %v431, %v435
  %v440 = vand.u32 2147483647, %v430
  %vm441 = vcmp.eq.f32.partialorder %v440, 8.507059e+37
  %v442 = vand.u32 %v430, 2147483648
  %v443 = vor.u32 1.1754944e-38, %v442
  %v444 = vsel %vm441, %v443, %v439
  %v445 = vmul.f32 1.0, %v444
  %v446 = vtanh.pop %v426
  %v447 = vmul.f32 %v445, %v391
  %449 = vrot.lane.b32.xlu0 %v446, 64
  %v450 = vpop.permute.xlu0 %449
  %v452 = vmul.f32 %v445, %v450
  %454 = vrot.lane.b32.xlu0 %v452, 32
  %v455 = vpop.permute.xlu0 %454
  %v457 = vadd.f32 %v447, %v455
  %v458 = vtanh.pop %v457
  %460 = vrot.lane.b32.xlu0 %v458, 64
  %v461 = vpop.permute.xlu0 %460
  %v463 = vmul.f32 %v445, %v461
  %465 = vrot.lane.b32.xlu0 %v463, 32
  %v466 = vpop.permute.xlu0 %465
  %s468 = scalar_lea.vmem [#allocation3], 32
  %469 = vst.msk [vmem:[%s468] sm:$0xff] %vm146, %v466
  %s470 = scalar_lea.vmem [#allocation2], 40
  %v471 = vld [vmem:[%s470] sm:$0xff]
  %v472 = vpack.c.bf16 %v463, %v463
  %474 = vrot.lane.b32.xlu0 %v472, 32
  %v475 = vpop.permute.xlu0 %474
  %v477 = vsel %vm146, %v475, 0
  %479 = vmatpush.bf16.msra.mxu0 0
  %480 = vmatpush.bf16.msra.mxu0 0
  %481 = vmatpush.bf16.msra.mxu0 0
  %482 = vmatpush.bf16.msra.mxu0 0
  %483 = vmatpush.bf16.msra.mxu0 0
  %484 = vmatpush.bf16.msra.mxu0 0
  %485 = vmatpush.bf16.msra.mxu0 %v143
  %486 = vmatpush.bf16.msra.mxu0 %v142
  %487 = vmatmul.bf16.gmra.mxu0 %v477
  %v488 = vpop.f32.mrf.mxu0
  %v489 = vadd.f32 0.0, %v488
  %v490 = vpop.f32.mrf.mxu0
  %491 = vdwg.mxu0
  %v492 = vadd.f32 %v471, %v489
  %v493 = vxor.u32 %v492, 2147483648
  %v494 = vmul.f32 %v493, 1.442695
  %v495 = vpow.pop %v494
  %v496 = vadd.f32 %v495, 1.0
  %v497 = vrcp.pop %v496
  %v498 = vmul.f32 %v496, %v497
  %v499 = vsub.f32 1.0, %v498
  %v500 = vmul.f32 %v497, %v499
  %v501 = vadd.f32 %v497, %v500
  %vm502 = vweird.f32 %v496
  %vm503 = vweird.f32 %v497
  %vm504 = vmor %vm502, %vm503
  %v505 = vsel %vm504, %v497, %v501
  %v506 = vand.u32 2147483647, %v496
  %vm507 = vcmp.eq.f32.partialorder %v506, 8.507059e+37
  %v508 = vand.u32 %v496, 2147483648
  %v509 = vor.u32 1.1754944e-38, %v508
  %v510 = vsel %vm507, %v509, %v505
  %v511 = vmul.f32 1.0, %v510
  %v512 = vtanh.pop %v492
  %v513 = vmul.f32 %v511, %v457
  %515 = vrot.lane.b32.xlu0 %v512, 64
  %v516 = vpop.permute.xlu0 %515
  %v518 = vmul.f32 %v511, %v516
  %520 = vrot.lane.b32.xlu0 %v518, 32
  %v521 = vpop.permute.xlu0 %520
  %v523 = vadd.f32 %v513, %v521
  %v524 = vtanh.pop %v523
  %526 = vrot.lane.b32.xlu0 %v524, 64
  %v527 = vpop.permute.xlu0 %526
  %v529 = vmul.f32 %v511, %v527
  %531 = vrot.lane.b32.xlu0 %v529, 32
  %v532 = vpop.permute.xlu0 %531
  %s534 = scalar_lea.vmem [#allocation3], 40
  %535 = vst.msk [vmem:[%s534] sm:$0xff] %vm146, %v532
  %s536 = scalar_lea.vmem [#allocation2], 48
  %v537 = vld [vmem:[%s536] sm:$0xff]
  %v538 = vpack.c.bf16 %v529, %v529
  %540 = vrot.lane.b32.xlu0 %v538, 32
  %v541 = vpop.permute.xlu0 %540
  %v543 = vsel %vm146, %v541, 0
  %545 = vmatpush.bf16.msra.mxu0 0
  %546 = vmatpush.bf16.msra.mxu0 0
  %547 = vmatpush.bf16.msra.mxu0 0
  %548 = vmatpush.bf16.msra.mxu0 0
  %549 = vmatpush.bf16.msra.mxu0 0
  %550 = vmatpush.bf16.msra.mxu0 0
  %551 = vmatpush.bf16.msra.mxu0 %v143
  %552 = vmatpush.bf16.msra.mxu0 %v142
  %553 = vmatmul.bf16.gmra.mxu0 %v543
  %v554 = vpop.f32.mrf.mxu0
  %v555 = vadd.f32 0.0, %v554
  %v556 = vpop.f32.mrf.mxu0
  %557 = vdwg.mxu0
  %v558 = vadd.f32 %v537, %v555
  %v559 = vxor.u32 %v558, 2147483648
  %v560 = vmul.f32 %v559, 1.442695
  %v561 = vpow.pop %v560
  %v562 = vadd.f32 %v561, 1.0
  %v563 = vrcp.pop %v562
  %v564 = vmul.f32 %v562, %v563
  %v565 = vsub.f32 1.0, %v564
  %v566 = vmul.f32 %v563, %v565
  %v567 = vadd.f32 %v563, %v566
  %vm568 = vweird.f32 %v562
  %vm569 = vweird.f32 %v563
  %vm570 = vmor %vm568, %vm569
  %v571 = vsel %vm570, %v563, %v567
  %v572 = vand.u32 2147483647, %v562
  %vm573 = vcmp.eq.f32.partialorder %v572, 8.507059e+37
  %v574 = vand.u32 %v562, 2147483648
  %v575 = vor.u32 1.1754944e-38, %v574
  %v576 = vsel %vm573, %v575, %v571
  %v577 = vmul.f32 1.0, %v576
  %v578 = vtanh.pop %v558
  %v579 = vmul.f32 %v577, %v523
  %581 = vrot.lane.b32.xlu0 %v578, 64
  %v582 = vpop.permute.xlu0 %581
  %v584 = vmul.f32 %v577, %v582
  %586 = vrot.lane.b32.xlu0 %v584, 32
  %v587 = vpop.permute.xlu0 %586
  %v589 = vadd.f32 %v579, %v587
  %v590 = vtanh.pop %v589
  %592 = vrot.lane.b32.xlu0 %v590, 64
  %v593 = vpop.permute.xlu0 %592
  %v595 = vmul.f32 %v577, %v593
  %597 = vrot.lane.b32.xlu0 %v595, 32
  %v598 = vpop.permute.xlu0 %597
  %s600 = scalar_lea.vmem [#allocation3], 48
  %601 = vst.msk [vmem:[%s600] sm:$0xff] %vm146, %v598
  %s602 = scalar_lea.vmem [#allocation2], 56
  %v603 = vld [vmem:[%s602] sm:$0xff]
  %v604 = vpack.c.bf16 %v595, %v595
  %606 = vrot.lane.b32.xlu0 %v604, 32
  %v607 = vpop.permute.xlu0 %606
  %v609 = vsel %vm146, %v607, 0
  %611 = vmatpush.bf16.msra.mxu0 0
  %612 = vmatpush.bf16.msra.mxu0 0
  %613 = vmatpush.bf16.msra.mxu0 0
  %614 = vmatpush.bf16.msra.mxu0 0
  %615 = vmatpush.bf16.msra.mxu0 0
  %616 = vmatpush.bf16.msra.mxu0 0
  %617 = vmatpush.bf16.msra.mxu0 %v143
  %618 = vmatpush.bf16.msra.mxu0 %v142
  %619 = vmatmul.bf16.gmra.mxu0 %v609
  %v620 = vpop.f32.mrf.mxu0
  %v621 = vadd.f32 0.0, %v620
  %v622 = vpop.f32.mrf.mxu0
  %623 = vdwg.mxu0
  %v624 = vadd.f32 %v603, %v621
  %v625 = vxor.u32 %v624, 2147483648
  %v626 = vmul.f32 %v625, 1.442695
  %v627 = vpow.pop %v626
  %v628 = vadd.f32 %v627, 1.0
  %v629 = vrcp.pop %v628
  %v630 = vmul.f32 %v628, %v629
  %v631 = vsub.f32 1.0, %v630
  %v632 = vmul.f32 %v629, %v631
  %v633 = vadd.f32 %v629, %v632
  %vm634 = vweird.f32 %v628
  %vm635 = vweird.f32 %v629
  %vm636 = vmor %vm634, %vm635
  %v637 = vsel %vm636, %v629, %v633
  %v638 = vand.u32 2147483647, %v628
  %vm639 = vcmp.eq.f32.partialorder %v638, 8.507059e+37
  %v640 = vand.u32 %v628, 2147483648
  %v641 = vor.u32 1.1754944e-38, %v640
  %v642 = vsel %vm639, %v641, %v637
  %v643 = vmul.f32 1.0, %v642
  %v644 = vtanh.pop %v624
  %v645 = vmul.f32 %v643, %v589
  %647 = vrot.lane.b32.xlu0 %v644, 64
  %v648 = vpop.permute.xlu0 %647
  %v650 = vmul.f32 %v643, %v648
  %652 = vrot.lane.b32.xlu0 %v650, 32
  %v653 = vpop.permute.xlu0 %652
  %v655 = vadd.f32 %v645, %v653
  %v656 = vtanh.pop %v655
  %658 = vrot.lane.b32.xlu0 %v656, 64
  %v659 = vpop.permute.xlu0 %658
  %v661 = vmul.f32 %v643, %v659
  %663 = vrot.lane.b32.xlu0 %v661, 32
  %v664 = vpop.permute.xlu0 %663
  %s666 = scalar_lea.vmem [#allocation3], 56
  %667 = vst.msk [vmem:[%s666] sm:$0xff] %vm146, %v664
  %v668 = vld [vmem:[#allocation3] sm:$0xff]
  %v669 = vld [vmem:[#allocation3 + $0x8] sm:$0xff]
  %v670 = vld [vmem:[#allocation3 + $0x10] sm:$0xff]
  %v671 = vld [vmem:[#allocation3 + $0x18] sm:$0xff]
  %v672 = vld [vmem:[#allocation3 + $0x20] sm:$0xff]
  %v673 = vld [vmem:[#allocation3 + $0x28] sm:$0xff]
  %v674 = vld [vmem:[#allocation3 + $0x30] sm:$0xff]
  %v675 = vld [vmem:[#allocation3 + $0x38] sm:$0xff]
  %v676 = vpack.c.bf16 %v669, %v668
  %v677 = vpack.c.bf16 %v671, %v670
  %v678 = vpack.c.bf16 %v673, %v672
  %v679 = vpack.c.bf16 %v675, %v674
  %v680 = vld [vmem:[%s4] sm:$0xf]
  %v681 = vld [vmem:[%s4 + $0x4] sm:$0xf]
  %v682 = vld [vmem:[%s4 + $0x8] sm:$0xf]
  %v683 = vld [vmem:[%s4 + $0xc] sm:$0xf]
  %v684 = vld [vmem:[%s6] sm:$0x1]
  %v686 = vperm.slane %v684, 0
  %v692 = vunpack.c.l.b16 %v680
  %v693 = vunpack.c.l.b16 %v681
  %v694 = vunpack.c.l.b16 %v682
  %v695 = vunpack.c.l.b16 %v683
  %v696 = vpack.c.b16 %v693, %v692
  %v697 = vpack.c.b16 %v695, %v694
  %v701 = vsel %vm146, %v676, 0
  %v704 = vsel %vm146, %v677, 0
  %v707 = vsel %vm146, %v678, 0
  %v710 = vsel %vm146, %v679, 0
  %712 = vmatpush.bf16.msra.mxu0 0
  %713 = vmatpush.bf16.msra.mxu0 0
  %714 = vmatpush.bf16.msra.mxu0 0
  %715 = vmatpush.bf16.msra.mxu0 0
  %716 = vmatpush.bf16.msra.mxu0 0
  %717 = vmatpush.bf16.msra.mxu0 0
  %718 = vmatpush.bf16.msra.mxu0 %v697
  %719 = vmatpush.bf16.msra.mxu0 %v696
  %720 = vmatmul.bf16.gmra.mxu0 %v701
  %v721 = vpop.f32.mrf.mxu0
  %v722 = vadd.f32 %v686, %v721
  %v723 = vpop.f32.mrf.mxu0
  %v724 = vadd.f32 %v686, %v723
  %725 = vmatmul.bf16.gmra.mxu0 %v704
  %v726 = vpop.f32.mrf.mxu0
  %v727 = vadd.f32 %v686, %v726
  %v728 = vpop.f32.mrf.mxu0
  %v729 = vadd.f32 %v686, %v728
  %730 = vmatmul.bf16.gmra.mxu0 %v707
  %v731 = vpop.f32.mrf.mxu0
  %v732 = vadd.f32 %v686, %v731
  %v733 = vpop.f32.mrf.mxu0
  %v734 = vadd.f32 %v686, %v733
  %735 = vmatmul.bf16.gmra.mxu0 %v710
  %v736 = vpop.f32.mrf.mxu0
  %v737 = vadd.f32 %v686, %v736
  %v738 = vpop.f32.mrf.mxu0
  %v739 = vadd.f32 %v686, %v738
  %740 = vdwg.mxu0
  %741 = vst [vmem:[#allocation2] sm:$0xff] %v722
  %742 = vst [vmem:[#allocation2 + $0x8] sm:$0xff] %v724
  %743 = vst [vmem:[#allocation2 + $0x10] sm:$0xff] %v727
  %744 = vst [vmem:[#allocation2 + $0x18] sm:$0xff] %v729
  %745 = vst [vmem:[#allocation2 + $0x20] sm:$0xff] %v732
  %746 = vst [vmem:[#allocation2 + $0x28] sm:$0xff] %v734
  %747 = vst [vmem:[#allocation2 + $0x30] sm:$0xff] %v737
  %748 = vst [vmem:[#allocation2 + $0x38] sm:$0xff] %v739
  %v749 = vld [vmem:[%s5] sm:$0xf]
  %v750 = vld [vmem:[%s5 + $0x4] sm:$0xf]
  %v751 = vld [vmem:[%s5 + $0x8] sm:$0xf]
  %v752 = vld [vmem:[%s5 + $0xc] sm:$0xf]
  %v753 = vld [vmem:[#allocation2] sm:$0xff]
  %v758 = vunpack.c.l.b16 %v749
  %v759 = vunpack.c.l.b16 %v750
  %v760 = vunpack.c.l.b16 %v751
  %v761 = vunpack.c.l.b16 %v752
  %v762 = vpack.c.b16 %v759, %v758
  %v763 = vpack.c.b16 %v761, %v760
  %766 = vmatpush.bf16.msra.mxu0 0
  %767 = vmatpush.bf16.msra.mxu0 0
  %768 = vmatpush.bf16.msra.mxu0 0
  %769 = vmatpush.bf16.msra.mxu0 0
  %770 = vmatpush.bf16.msra.mxu0 0
  %771 = vmatpush.bf16.msra.mxu0 0
  %772 = vmatpush.bf16.msra.mxu0 %v763
  %773 = vmatpush.bf16.msra.mxu0 %v762
  %774 = vmatmul.bf16.gmra.mxu0 %v148
  %v775 = vpop.f32.mrf.mxu0
  %v776 = vadd.f32 0.0, %v775
  %v777 = vpop.f32.mrf.mxu0
  %778 = vdwg.mxu0
  %v779 = vadd.f32 %v753, %v776
  %v780 = vxor.u32 %v779, 2147483648
  %v781 = vmul.f32 %v780, 1.442695
  %v782 = vpow.pop %v781
  %v783 = vadd.f32 %v782, 1.0
  %v784 = vrcp.pop %v783
  %v785 = vmul.f32 %v783, %v784
  %v786 = vsub.f32 1.0, %v785
  %v787 = vmul.f32 %v784, %v786
  %v788 = vadd.f32 %v784, %v787
  %vm789 = vweird.f32 %v783
  %vm790 = vweird.f32 %v784
  %vm791 = vmor %vm789, %vm790
  %v792 = vsel %vm791, %v784, %v788
  %v793 = vand.u32 2147483647, %v783
  %vm794 = vcmp.eq.f32.partialorder %v793, 8.507059e+37
  %v795 = vand.u32 %v783, 2147483648
  %v796 = vor.u32 1.1754944e-38, %v795
  %v797 = vsel %vm794, %v796, %v792
  %v798 = vmul.f32 1.0, %v797
  %v799 = vtanh.pop %v779
  %v800 = vmul.f32 %v798, 0.0
  %802 = vrot.lane.b32.xlu0 %v799, 64
  %v803 = vpop.permute.xlu0 %802
  %v805 = vmul.f32 %v798, %v803
  %807 = vrot.lane.b32.xlu0 %v805, 32
  %v808 = vpop.permute.xlu0 %807
  %v810 = vadd.f32 %v800, %v808
  %v811 = vtanh.pop %v810
  %813 = vrot.lane.b32.xlu0 %v811, 64
  %v814 = vpop.permute.xlu0 %813
  %v816 = vmul.f32 %v798, %v814
  %v817 = vld [vmem:[%s206] sm:$0xff]
  %v818 = vpack.c.bf16 %v816, %v816
  %820 = vrot.lane.b32.xlu0 %v818, 32
  %v821 = vpop.permute.xlu0 %820
  %v823 = vsel %vm146, %v821, 0
  %825 = vmatpush.bf16.msra.mxu0 0
  %826 = vmatpush.bf16.msra.mxu0 0
  %827 = vmatpush.bf16.msra.mxu0 0
  %828 = vmatpush.bf16.msra.mxu0 0
  %829 = vmatpush.bf16.msra.mxu0 0
  %830 = vmatpush.bf16.msra.mxu0 0
  %831 = vmatpush.bf16.msra.mxu0 %v763
  %832 = vmatpush.bf16.msra.mxu0 %v762
  %833 = vmatmul.bf16.gmra.mxu0 %v823
  %v834 = vpop.f32.mrf.mxu0
  %v835 = vadd.f32 0.0, %v834
  %v836 = vpop.f32.mrf.mxu0
  %837 = vdwg.mxu0
  %v838 = vadd.f32 %v817, %v835
  %v839 = vxor.u32 %v838, 2147483648
  %v840 = vmul.f32 %v839, 1.442695
  %v841 = vpow.pop %v840
  %v842 = vadd.f32 %v841, 1.0
  %v843 = vrcp.pop %v842
  %v844 = vmul.f32 %v842, %v843
  %v845 = vsub.f32 1.0, %v844
  %v846 = vmul.f32 %v843, %v845
  %v847 = vadd.f32 %v843, %v846
  %vm848 = vweird.f32 %v842
  %vm849 = vweird.f32 %v843
  %vm850 = vmor %vm848, %vm849
  %v851 = vsel %vm850, %v843, %v847
  %v852 = vand.u32 2147483647, %v842
  %vm853 = vcmp.eq.f32.partialorder %v852, 8.507059e+37
  %v854 = vand.u32 %v842, 2147483648
  %v855 = vor.u32 1.1754944e-38, %v854
  %v856 = vsel %vm853, %v855, %v851
  %v857 = vmul.f32 1.0, %v856
  %v858 = vtanh.pop %v838
  %v859 = vmul.f32 %v857, %v810
  %861 = vrot.lane.b32.xlu0 %v858, 64
  %v862 = vpop.permute.xlu0 %861
  %v864 = vmul.f32 %v857, %v862
  %866 = vrot.lane.b32.xlu0 %v864, 32
  %v867 = vpop.permute.xlu0 %866
  %v869 = vadd.f32 %v859, %v867
  %v870 = vtanh.pop %v869
  %872 = vrot.lane.b32.xlu0 %v870, 64
  %v873 = vpop.permute.xlu0 %872
  %v875 = vmul.f32 %v857, %v873
  %v876 = vld [vmem:[%s272] sm:$0xff]
  %v877 = vpack.c.bf16 %v875, %v875
  %879 = vrot.lane.b32.xlu0 %v877, 32
  %v880 = vpop.permute.xlu0 %879
  %v882 = vsel %vm146, %v880, 0
  %884 = vmatpush.bf16.msra.mxu0 0
  %885 = vmatpush.bf16.msra.mxu0 0
  %886 = vmatpush.bf16.msra.mxu0 0
  %887 = vmatpush.bf16.msra.mxu0 0
  %888 = vmatpush.bf16.msra.mxu0 0
  %889 = vmatpush.bf16.msra.mxu0 0
  %890 = vmatpush.bf16.msra.mxu0 %v763
  %891 = vmatpush.bf16.msra.mxu0 %v762
  %892 = vmatmul.bf16.gmra.mxu0 %v882
  %v893 = vpop.f32.mrf.mxu0
  %v894 = vadd.f32 0.0, %v893
  %v895 = vpop.f32.mrf.mxu0
  %896 = vdwg.mxu0
  %v897 = vadd.f32 %v876, %v894
  %v898 = vxor.u32 %v897, 2147483648
  %v899 = vmul.f32 %v898, 1.442695
  %v900 = vpow.pop %v899
  %v901 = vadd.f32 %v900, 1.0
  %v902 = vrcp.pop %v901
  %v903 = vmul.f32 %v901, %v902
  %v904 = vsub.f32 1.0, %v903
  %v905 = vmul.f32 %v902, %v904
  %v906 = vadd.f32 %v902, %v905
  %vm907 = vweird.f32 %v901
  %vm908 = vweird.f32 %v902
  %vm909 = vmor %vm907, %vm908
  %v910 = vsel %vm909, %v902, %v906
  %v911 = vand.u32 2147483647, %v901
  %vm912 = vcmp.eq.f32.partialorder %v911, 8.507059e+37
  %v913 = vand.u32 %v901, 2147483648
  %v914 = vor.u32 1.1754944e-38, %v913
  %v915 = vsel %vm912, %v914, %v910
  %v916 = vmul.f32 1.0, %v915
  %v917 = vtanh.pop %v897
  %v918 = vmul.f32 %v916, %v869
  %920 = vrot.lane.b32.xlu0 %v917, 64
  %v921 = vpop.permute.xlu0 %920
  %v923 = vmul.f32 %v916, %v921
  %925 = vrot.lane.b32.xlu0 %v923, 32
  %v926 = vpop.permute.xlu0 %925
  %v928 = vadd.f32 %v918, %v926
  %v929 = vtanh.pop %v928
  %931 = vrot.lane.b32.xlu0 %v929, 64
  %v932 = vpop.permute.xlu0 %931
  %v934 = vmul.f32 %v916, %v932
  %v935 = vld [vmem:[%s338] sm:$0xff]
  %v936 = vpack.c.bf16 %v934, %v934
  %938 = vrot.lane.b32.xlu0 %v936, 32
  %v939 = vpop.permute.xlu0 %938
  %v941 = vsel %vm146, %v939, 0
  %943 = vmatpush.bf16.msra.mxu0 0
  %944 = vmatpush.bf16.msra.mxu0 0
  %945 = vmatpush.bf16.msra.mxu0 0
  %946 = vmatpush.bf16.msra.mxu0 0
  %947 = vmatpush.bf16.msra.mxu0 0
  %948 = vmatpush.bf16.msra.mxu0 0
  %949 = vmatpush.bf16.msra.mxu0 %v763
  %950 = vmatpush.bf16.msra.mxu0 %v762
  %951 = vmatmul.bf16.gmra.mxu0 %v941
  %v952 = vpop.f32.mrf.mxu0
  %v953 = vadd.f32 0.0, %v952
  %v954 = vpop.f32.mrf.mxu0
  %955 = vdwg.mxu0
  %v956 = vadd.f32 %v935, %v953
  %v957 = vxor.u32 %v956, 2147483648
  %v958 = vmul.f32 %v957, 1.442695
  %v959 = vpow.pop %v958
  %v960 = vadd.f32 %v959, 1.0
  %v961 = vrcp.pop %v960
  %v962 = vmul.f32 %v960, %v961
  %v963 = vsub.f32 1.0, %v962
  %v964 = vmul.f32 %v961, %v963
  %v965 = vadd.f32 %v961, %v964
  %vm966 = vweird.f32 %v960
  %vm967 = vweird.f32 %v961
  %vm968 = vmor %vm966, %vm967
  %v969 = vsel %vm968, %v961, %v965
  %v970 = vand.u32 2147483647, %v960
  %vm971 = vcmp.eq.f32.partialorder %v970, 8.507059e+37
  %v972 = vand.u32 %v960, 2147483648
  %v973 = vor.u32 1.1754944e-38, %v972
  %v974 = vsel %vm971, %v973, %v969
  %v975 = vmul.f32 1.0, %v974
  %v976 = vtanh.pop %v956
  %v977 = vmul.f32 %v975, %v928
  %979 = vrot.lane.b32.xlu0 %v976, 64
  %v980 = vpop.permute.xlu0 %979
  %v982 = vmul.f32 %v975, %v980
  %984 = vrot.lane.b32.xlu0 %v982, 32
  %v985 = vpop.permute.xlu0 %984
  %v987 = vadd.f32 %v977, %v985
  %v988 = vtanh.pop %v987
  %990 = vrot.lane.b32.xlu0 %v988, 64
  %v991 = vpop.permute.xlu0 %990
  %v993 = vmul.f32 %v975, %v991
  %v994 = vld [vmem:[%s404] sm:$0xff]
  %v995 = vpack.c.bf16 %v993, %v993
  %997 = vrot.lane.b32.xlu0 %v995, 32
  %v998 = vpop.permute.xlu0 %997
  %v1000 = vsel %vm146, %v998, 0
  %1002 = vmatpush.bf16.msra.mxu0 0
  %1003 = vmatpush.bf16.msra.mxu0 0
  %1004 = vmatpush.bf16.msra.mxu0 0
  %1005 = vmatpush.bf16.msra.mxu0 0
  %1006 = vmatpush.bf16.msra.mxu0 0
  %1007 = vmatpush.bf16.msra.mxu0 0
  %1008 = vmatpush.bf16.msra.mxu0 %v763
  %1009 = vmatpush.bf16.msra.mxu0 %v762
  %1010 = vmatmul.bf16.gmra.mxu0 %v1000
  %v1011 = vpop.f32.mrf.mxu0
  %v1012 = vadd.f32 0.0, %v1011
  %v1013 = vpop.f32.mrf.mxu0
  %1014 = vdwg.mxu0
  %v1015 = vadd.f32 %v994, %v1012
  %v1016 = vxor.u32 %v1015, 2147483648
  %v1017 = vmul.f32 %v1016, 1.442695
  %v1018 = vpow.pop %v1017
  %v1019 = vadd.f32 %v1018, 1.0
  %v1020 = vrcp.pop %v1019
  %v1021 = vmul.f32 %v1019, %v1020
  %v1022 = vsub.f32 1.0, %v1021
  %v1023 = vmul.f32 %v1020, %v1022
  %v1024 = vadd.f32 %v1020, %v1023
  %vm1025 = vweird.f32 %v1019
  %vm1026 = vweird.f32 %v1020
  %vm1027 = vmor %vm1025, %vm1026
  %v1028 = vsel %vm1027, %v1020, %v1024
  %v1029 = vand.u32 2147483647, %v1019
  %vm1030 = vcmp.eq.f32.partialorder %v1029, 8.507059e+37
  %v1031 = vand.u32 %v1019, 2147483648
  %v1032 = vor.u32 1.1754944e-38, %v1031
  %v1033 = vsel %vm1030, %v1032, %v1028
  %v1034 = vmul.f32 1.0, %v1033
  %v1035 = vtanh.pop %v1015
  %v1036 = vmul.f32 %v1034, %v987
  %1038 = vrot.lane.b32.xlu0 %v1035, 64
  %v1039 = vpop.permute.xlu0 %1038
  %v1041 = vmul.f32 %v1034, %v1039
  %1043 = vrot.lane.b32.xlu0 %v1041, 32
  %v1044 = vpop.permute.xlu0 %1043
  %v1046 = vadd.f32 %v1036, %v1044
  %v1047 = vtanh.pop %v1046
  %1049 = vrot.lane.b32.xlu0 %v1047, 64
  %v1050 = vpop.permute.xlu0 %1049
  %v1052 = vmul.f32 %v1034, %v1050
  %v1053 = vld [vmem:[%s470] sm:$0xff]
  %v1054 = vpack.c.bf16 %v1052, %v1052
  %1056 = vrot.lane.b32.xlu0 %v1054, 32
  %v1057 = vpop.permute.xlu0 %1056
  %v1059 = vsel %vm146, %v1057, 0
  %1061 = vmatpush.bf16.msra.mxu0 0
  %1062 = vmatpush.bf16.msra.mxu0 0
  %1063 = vmatpush.bf16.msra.mxu0 0
  %1064 = vmatpush.bf16.msra.mxu0 0
  %1065 = vmatpush.bf16.msra.mxu0 0
  %1066 = vmatpush.bf16.msra.mxu0 0
  %1067 = vmatpush.bf16.msra.mxu0 %v763
  %1068 = vmatpush.bf16.msra.mxu0 %v762
  %1069 = vmatmul.bf16.gmra.mxu0 %v1059
  %v1070 = vpop.f32.mrf.mxu0
  %v1071 = vadd.f32 0.0, %v1070
  %v1072 = vpop.f32.mrf.mxu0
  %1073 = vdwg.mxu0
  %v1074 = vadd.f32 %v1053, %v1071
  %v1075 = vxor.u32 %v1074, 2147483648
  %v1076 = vmul.f32 %v1075, 1.442695
  %v1077 = vpow.pop %v1076
  %v1078 = vadd.f32 %v1077, 1.0
  %v1079 = vrcp.pop %v1078
  %v1080 = vmul.f32 %v1078, %v1079
  %v1081 = vsub.f32 1.0, %v1080
  %v1082 = vmul.f32 %v1079, %v1081
  %v1083 = vadd.f32 %v1079, %v1082
  %vm1084 = vweird.f32 %v1078
  %vm1085 = vweird.f32 %v1079
  %vm1086 = vmor %vm1084, %vm1085
  %v1087 = vsel %vm1086, %v1079, %v1083
  %v1088 = vand.u32 2147483647, %v1078
  %vm1089 = vcmp.eq.f32.partialorder %v1088, 8.507059e+37
  %v1090 = vand.u32 %v1078, 2147483648
  %v1091 = vor.u32 1.1754944e-38, %v1090
  %v1092 = vsel %vm1089, %v1091, %v1087
  %v1093 = vmul.f32 1.0, %v1092
  %v1094 = vtanh.pop %v1074
  %v1095 = vmul.f32 %v1093, %v1046
  %1097 = vrot.lane.b32.xlu0 %v1094, 64
  %v1098 = vpop.permute.xlu0 %1097
  %v1100 = vmul.f32 %v1093, %v1098
  %1102 = vrot.lane.b32.xlu0 %v1100, 32
  %v1103 = vpop.permute.xlu0 %1102
  %v1105 = vadd.f32 %v1095, %v1103
  %v1106 = vtanh.pop %v1105
  %1108 = vrot.lane.b32.xlu0 %v1106, 64
  %v1109 = vpop.permute.xlu0 %1108
  %v1111 = vmul.f32 %v1093, %v1109
  %v1112 = vld [vmem:[%s536] sm:$0xff]
  %v1113 = vpack.c.bf16 %v1111, %v1111
  %1115 = vrot.lane.b32.xlu0 %v1113, 32
  %v1116 = vpop.permute.xlu0 %1115
  %v1118 = vsel %vm146, %v1116, 0
  %1120 = vmatpush.bf16.msra.mxu0 0
  %1121 = vmatpush.bf16.msra.mxu0 0
  %1122 = vmatpush.bf16.msra.mxu0 0
  %1123 = vmatpush.bf16.msra.mxu0 0
  %1124 = vmatpush.bf16.msra.mxu0 0
  %1125 = vmatpush.bf16.msra.mxu0 0
  %1126 = vmatpush.bf16.msra.mxu0 %v763
  %1127 = vmatpush.bf16.msra.mxu0 %v762
  %1128 = vmatmul.bf16.gmra.mxu0 %v1118
  %v1129 = vpop.f32.mrf.mxu0
  %v1130 = vadd.f32 0.0, %v1129
  %v1131 = vpop.f32.mrf.mxu0
  %1132 = vdwg.mxu0
  %v1133 = vadd.f32 %v1112, %v1130
  %v1134 = vxor.u32 %v1133, 2147483648
  %v1135 = vmul.f32 %v1134, 1.442695
  %v1136 = vpow.pop %v1135
  %v1137 = vadd.f32 %v1136, 1.0
  %v1138 = vrcp.pop %v1137
  %v1139 = vmul.f32 %v1137, %v1138
  %v1140 = vsub.f32 1.0, %v1139
  %v1141 = vmul.f32 %v1138, %v1140
  %v1142 = vadd.f32 %v1138, %v1141
  %vm1143 = vweird.f32 %v1137
  %vm1144 = vweird.f32 %v1138
  %vm1145 = vmor %vm1143, %vm1144
  %v1146 = vsel %vm1145, %v1138, %v1142
  %v1147 = vand.u32 2147483647, %v1137
  %vm1148 = vcmp.eq.f32.partialorder %v1147, 8.507059e+37
  %v1149 = vand.u32 %v1137, 2147483648
  %v1150 = vor.u32 1.1754944e-38, %v1149
  %v1151 = vsel %vm1148, %v1150, %v1146
  %v1152 = vmul.f32 1.0, %v1151
  %v1153 = vtanh.pop %v1133
  %v1154 = vmul.f32 %v1152, %v1105
  %1156 = vrot.lane.b32.xlu0 %v1153, 64
  %v1157 = vpop.permute.xlu0 %1156
  %v1159 = vmul.f32 %v1152, %v1157
  %1161 = vrot.lane.b32.xlu0 %v1159, 32
  %v1162 = vpop.permute.xlu0 %1161
  %v1164 = vadd.f32 %v1154, %v1162
  %v1165 = vtanh.pop %v1164
  %1167 = vrot.lane.b32.xlu0 %v1165, 64
  %v1168 = vpop.permute.xlu0 %1167
  %v1170 = vmul.f32 %v1152, %v1168
  %v1171 = vld [vmem:[%s602] sm:$0xff]
  %v1172 = vpack.c.bf16 %v1170, %v1170
  %1174 = vrot.lane.b32.xlu0 %v1172, 32
  %v1175 = vpop.permute.xlu0 %1174
  %v1177 = vsel %vm146, %v1175, 0
  %1179 = vmatpush.bf16.msra.mxu0 0
  %1180 = vmatpush.bf16.msra.mxu0 0
  %1181 = vmatpush.bf16.msra.mxu0 0
  %1182 = vmatpush.bf16.msra.mxu0 0
  %1183 = vmatpush.bf16.msra.mxu0 0
  %1184 = vmatpush.bf16.msra.mxu0 0
  %1185 = vmatpush.bf16.msra.mxu0 %v763
  %1186 = vmatpush.bf16.msra.mxu0 %v762
  %1187 = vmatmul.bf16.gmra.mxu0 %v1177
  %v1188 = vpop.f32.mrf.mxu0
  %v1189 = vadd.f32 0.0, %v1188
  %v1190 = vpop.f32.mrf.mxu0
  %1191 = vdwg.mxu0
  %v1192 = vadd.f32 %v1171, %v1189
  %v1193 = vxor.u32 %v1192, 2147483648
  %v1194 = vmul.f32 %v1193, 1.442695
  %v1195 = vpow.pop %v1194
  %v1196 = vadd.f32 %v1195, 1.0
  %v1197 = vrcp.pop %v1196
  %v1198 = vmul.f32 %v1196, %v1197
  %v1199 = vsub.f32 1.0, %v1198
  %v1200 = vmul.f32 %v1197, %v1199
  %v1201 = vadd.f32 %v1197, %v1200
  %vm1202 = vweird.f32 %v1196
  %vm1203 = vweird.f32 %v1197
  %vm1204 = vmor %vm1202, %vm1203
  %v1205 = vsel %vm1204, %v1197, %v1201
  %v1206 = vand.u32 2147483647, %v1196
  %vm1207 = vcmp.eq.f32.partialorder %v1206, 8.507059e+37
  %v1208 = vand.u32 %v1196, 2147483648
  %v1209 = vor.u32 1.1754944e-38, %v1208
  %v1210 = vsel %vm1207, %v1209, %v1205
  %v1211 = vmul.f32 1.0, %v1210
  %v1212 = vtanh.pop %v1192
  %v1213 = vmul.f32 %v1211, %v1164
  %1215 = vrot.lane.b32.xlu0 %v1212, 64
  %v1216 = vpop.permute.xlu0 %1215
  %v1218 = vmul.f32 %v1211, %v1216
  %1220 = vrot.lane.b32.xlu0 %v1218, 32
  %v1221 = vpop.permute.xlu0 %1220
  %v1223 = vadd.f32 %v1213, %v1221
  %v1224 = vtanh.pop %v1223
  %1226 = vrot.lane.b32.xlu0 %v1224, 64
  %v1227 = vpop.permute.xlu0 %1226
  %v1229 = vmul.f32 %v1211, %v1227
  %v1230 = vpack.c.bf16 %v1229, %v1229
  %v1231 = vld [vmem:[%s7] sm:$0xf]
  %v1232 = vld [vmem:[%s7 + $0x4] sm:$0xf]
  %v1233 = vld [vmem:[%s7 + $0x8] sm:$0xf]
  %v1234 = vld [vmem:[%s7 + $0xc] sm:$0xf]
  %v1235 = vld [vmem:[%s8] sm:$0x1]
  %v1237 = vperm.slane %v1235, 0
  %1240 = vrot.lane.b32.xlu0 %v1230, 32
  %v1241 = vpop.permute.xlu0 %1240
  %v1246 = vunpack.c.l.b16 %v1231
  %v1247 = vunpack.c.l.b16 %v1232
  %v1248 = vunpack.c.l.b16 %v1233
  %v1249 = vunpack.c.l.b16 %v1234
  %v1250 = vpack.c.b16 %v1247, %v1246
  %v1251 = vpack.c.b16 %v1249, %v1248
  %v1255 = vsel %vm146, %v1241, 0
  %1257 = vmatpush.bf16.msra.mxu0 0
  %1258 = vmatpush.bf16.msra.mxu0 0
  %1259 = vmatpush.bf16.msra.mxu0 0
  %1260 = vmatpush.bf16.msra.mxu0 0
  %1261 = vmatpush.bf16.msra.mxu0 0
  %1262 = vmatpush.bf16.msra.mxu0 0
  %1263 = vmatpush.bf16.msra.mxu0 %v1251
  %1264 = vmatpush.bf16.msra.mxu0 %v1250
  %1265 = vmatmul.bf16.gmra.mxu0 %v1255
  %v1266 = vpop.f32.mrf.mxu0
  %v1267 = vadd.f32 %v1237, %v1266
  %v1268 = vpop.f32.mrf.mxu0
  %1269 = vdwg.mxu0
  %v1270 = vmax.f32 %v1267, 0.0
  %v1271 = vpack.c.bf16 %v1270, %v1270
  %v1272 = vld [vmem:[%s9] sm:$0xf]
  %v1273 = vld [vmem:[%s9 + $0x4] sm:$0xf]
  %v1274 = vld [vmem:[%s10] sm:$0x1]
  %v1276 = vperm.slane %v1274, 0
  %v1280 = vunpack.c.l.b16 %v1272
  %v1281 = vunpack.c.l.b16 %v1273
  %v1282 = vpack.c.b16 %v1281, %v1280
  %v1285 = vsel %vm79, %v1271, 0
  %1287 = vmatpush.bf16.msra.mxu0 0
  %1288 = vmatpush.bf16.msra.mxu0 0
  %1289 = vmatpush.bf16.msra.mxu0 0
  %1290 = vmatpush.bf16.msra.mxu0 0
  %1291 = vmatpush.bf16.msra.mxu0 0
  %1292 = vmatpush.bf16.msra.mxu0 0
  %1293 = vmatpush.bf16.msra.mxu0 0
  %1294 = vmatpush.bf16.msra.mxu0 %v1282
  %1295 = vmatmul.bf16.gmra.mxu0 %v1285
  %v1296 = vpop.f32.mrf.mxu0
  %v1297 = vadd.f32 %v1276, %v1296
  %v1298 = vpop.f32.mrf.mxu0
  %1299 = vdwg.mxu0
  %vm1300 = vcmask 31744
  %1301 = vst.msk [vmem:[%s11] sm:$0xff] %vm1300, %v1297
  // Predicated region
  $region46: #{sensitivity_lstm_forward.1} parent=0 // pred_check
    _
  $region47: #{sensitivity_lstm_forward.1} parent=0 // pred_check_branch
    %1303 = sbr.rel (0) target = $region49
  $region48: #{sensitivity_lstm_forward.1} parent=0 // pred_region
    _
  $region49: #{sensitivity_lstm_forward.1} parent=0 // pred_fallthru
    _
  // Predicated region
  $region50: #{sensitivity_lstm_forward.1} parent=0 // pred_check
    _
  $region51: #{sensitivity_lstm_forward.1} parent=0 // pred_check_branch
    %1305 = sbr.rel (0) target = $region53
  $region52: #{sensitivity_lstm_forward.1} parent=0 // pred_region
    _
  $region53: #{sensitivity_lstm_forward.1} parent=0 // pred_fallthru
    _

</llo_original>
